<compile_context>
chip_gen: v6e
topology: v6e:2x2x1
jax: 0.10.0
libtpu: 0.0.40
codegen_flags: <defaults>
</compile_context>

<pallas_src>
import functools
import math

import jax
import jax.numpy as jnp
import numpy as np
from jax.experimental import pallas as pl
from jax.experimental.pallas import tpu as pltpu


def _round_up(n, m):
    return ((n + m - 1) // m) * m


def _elu(v):
    # F.elu with alpha=1.0.  exp(min(v, 0)) keeps the untaken branch finite.
    # TODO(synk): expm1 would avoid cancellation for v ~ 0; kept exp(v)-1 since
    # it is the previously-validated lowering path and the delta is ~f32 eps.
    return jnp.where(v > 0, v, jnp.exp(jnp.minimum(v, 0.0)) - 1.0)


def _linear_bf16(h, w_ref, b_ref):
    # bf16 x bf16 MXU matmul with f32 accumulation; f32 bias add.
    return (
        jnp.dot(h.astype(jnp.bfloat16), w_ref[...],
                preferred_element_type=jnp.float32)
        + b_ref[...]
    )


def vae_kernel(x_ref, eps_ref,
               w1_ref, b1_ref, w2_ref, b2_ref,
               wml_ref, bml_ref,
               w3_ref, b3_ref, w4_ref, b4_ref, w5_ref, b5_ref,
               recon_ref, mulogvar_ref):
    x = x_ref[...]                        # (TB, d_in) bf16

    # ---- encode ----
    h1 = _elu(_linear_bf16(x, w1_ref, b1_ref))
    h2 = _elu(_linear_bf16(h1, w2_ref, b2_ref))
    # Fused, lane-padded head: columns [0, d_half) hold mu (rest zero),
    # columns [d_half, 2*d_half) hold logvar (rest zero).
    ml = _linear_bf16(h2, wml_ref, bml_ref)     # (TB, 2*d_half) f32
    d_half = ml.shape[-1] // 2
    mu_p = ml[:, :d_half]
    lv_p = ml[:, d_half:]

    # ---- reparameterize ----
    # Padded lanes: mu=0, logvar=0 -> std=1, eps=0 -> z=0, and fc3's padded
    # weight rows are zero, so they contribute nothing downstream.
    std = jnp.exp(0.5 * lv_p)
    z = eps_ref[...] * std + mu_p               # (TB, d_half) f32

    # ---- decode ----
    d2 = _elu(_linear_bf16(z, w3_ref, b3_ref))
    d1 = _elu(_linear_bf16(d2, w4_ref, b4_ref))
    recon = _linear_bf16(d1, w5_ref, b5_ref)

    recon_ref[...] = recon.astype(recon_ref.dtype)
    mulogvar_ref[...] = ml.astype(mulogvar_ref.dtype)


def vae_forward(x, eps, params, *, d_in, block_b=512):
    """x: any shape flattening to (-1, d_in); eps: (B, d_out) gaussian noise.

    Returns (recon, mu, logvar), matching VAE.forward of the PyTorch module.
    """
    # Stream x as bf16 (identical numerics to casting in-kernel for the bf16
    # matmul); keep recon / mu / logvar outputs f32.
    x2 = x.reshape(-1, d_in).astype(jnp.bfloat16)
    B = x2.shape[0]
    (w1, b1, w2, b2, wml, bml, w3, b3, w4, b4, w5, b5) = params
    h1d = w1.shape[1]
    h2d = w2.shape[1]
    two_d_half = wml.shape[1]
    d_half = two_d_half // 2
    d_out = eps.shape[-1]

    # Pad the noise to the padded latent width (zero-filled lanes).
    eps = eps.astype(jnp.float32)
    if d_half != d_out:
        eps = jnp.pad(eps, ((0, 0), (0, d_half - d_out)))

    # Batch tile: multiple of 16 (bf16 sublane packing; also covers f32's 8),
    # capped at block_b, and chosen so the grid has >= 2 steps when B allows
    # (feeds both v7x TensorCores) while keeping ragged-batch padding small.
    align = 16
    tb = min(block_b, max(align, _round_up(-(-B // 2), align)))
    B_pad = _round_up(B, tb)
    if B_pad != B:
        x2 = jnp.pad(x2, ((0, B_pad - B), (0, 0)))
        eps = jnp.pad(eps, ((0, B_pad - B), (0, 0)))
    grid = (B_pad // tb,)

    weights = [w1, b1, w2, b2, wml, bml, w3, b3, w4, b4, w5, b5]
    # Full-array blocks with constant index maps: weights stay VMEM-resident.
    wspec = lambda arr: pl.BlockSpec(arr.shape, lambda i: (0, 0))

    # Advisory cost estimate for XLA scheduling around the custom call.
    flops = 2 * B_pad * (d_in * h1d + h1d * h2d + h2d * two_d_half
                         + d_half * h2d + h2d * h1d + h1d * d_in)
    transcendentals = B_pad * (h1d + h2d + d_half + h2d + h1d)
    nbytes = lambda a: math.prod(a.shape) * jnp.dtype(a.dtype).itemsize
    bytes_accessed = (nbytes(x2) + nbytes(eps)
                      + sum(nbytes(w) for w in weights)
                      + B_pad * d_in * 4 + B_pad * two_d_half * 4)

    out_shapes = (
        jax.ShapeDtypeStruct((B_pad, d_in), jnp.float32),
        jax.ShapeDtypeStruct((B_pad, two_d_half), jnp.float32),
    )
    recon, mulv = pl.pallas_call(
        vae_kernel,
        out_shape=out_shapes,
        grid_spec=pltpu.PrefetchScalarGridSpec(
            num_scalar_prefetch=0,
            grid=grid,
            in_specs=[pl.BlockSpec((tb, d_in), lambda i: (i, 0)),
                      pl.BlockSpec((tb, d_half), lambda i: (i, 0))]
                     + [wspec(w) for w in weights],
            out_specs=[pl.BlockSpec((tb, d_in), lambda i: (i, 0)),
                       pl.BlockSpec((tb, two_d_half), lambda i: (i, 0))],
        ),
        compiler_params=pltpu.CompilerParams(
            dimension_semantics=("parallel",)),
        cost_estimate=pl.CostEstimate(
            flops=int(flops),
            transcendentals=int(transcendentals),
            bytes_accessed=int(bytes_accessed)),
    )(x2, eps, *weights)

    mu = mulv[:, :d_out]
    logvar = mulv[:, d_half:d_half + d_out]
    if B_pad != B:
        recon, mu, logvar = recon[:B], mu[:B], logvar[:B]
    return recon, mu, logvar


def init_linear(key, fan_in, fan_out, w_dtype=jnp.bfloat16):
    """PyTorch nn.Linear default init; W as (in, out) bf16, b as (1, out) f32."""
    kw, kb = jax.random.split(key)
    bound = 1.0 / np.sqrt(fan_in)
    w = jax.random.uniform(kw, (fan_in, fan_out), jnp.float32, -bound, bound)
    b = jax.random.uniform(kb, (1, fan_out), jnp.float32, -bound, bound)
    return w.astype(w_dtype), b


def make_params(key, d_in, h1, h2, d_out, w_dtype=jnp.bfloat16):
    keys = jax.random.split(key, 7)
    w1, b1 = init_linear(keys[0], d_in, h1, w_dtype)
    w2, b2 = init_linear(keys[1], h1, h2, w_dtype)
    wm, bm = init_linear(keys[2], h2, d_out, w_dtype)
    wlv, blv = init_linear(keys[3], h2, d_out, w_dtype)
    w3, b3 = init_linear(keys[4], d_out, h2, w_dtype)
    w4, b4 = init_linear(keys[5], h2, h1, w_dtype)
    w5, b5 = init_linear(keys[6], h1, d_in, w_dtype)

    # Fuse mu/logvar heads and zero-pad each half to d_half columns
    # ([mu | 0 | logvar | 0]) so the kernel's head output block is 128-lane
    # dense; pad fc3's input rows to d_half accordingly (zero rows).
    d_half = _round_up(d_out, 64)
    pw = jnp.zeros((h2, d_half - d_out), w_dtype)
    pb = jnp.zeros((1, d_half - d_out), jnp.float32)
    wml = jnp.concatenate([wm, pw, wlv, pw], axis=1)
    bml = jnp.concatenate([bm, pb, blv, pb], axis=1)
    w3p = jnp.concatenate(
        [w3, jnp.zeros((d_half - d_out, h2), w_dtype)], axis=0)
    return (w1, b1, w2, b2, wml, bml, w3p, b3, w4, b4, w5, b5)


def vae_reference(x, eps, params, d_in):
    """Plain-JAX reference mirroring the kernel's numerics (bf16 matmul ops)."""
    (w1, b1, w2, b2, wml, bml, w3, b3, w4, b4, w5, b5) = params
    d_half = wml.shape[1] // 2
    d_out = eps.shape[-1]
    lin = lambda h, w, b: (jnp.dot(h.astype(jnp.bfloat16), w,
                                   preferred_element_type=jnp.float32) + b)
    elu = lambda v: jnp.where(v > 0, v, jnp.exp(jnp.minimum(v, 0.0)) - 1.0)
    x2 = x.reshape(-1, d_in)
    eps_p = jnp.pad(eps.astype(jnp.float32), ((0, 0), (0, d_half - d_out)))
    h1 = elu(lin(x2, w1, b1))
    h2 = elu(lin(h1, w2, b2))
    ml = lin(h2, wml, bml)
    mu = ml[:, :d_out]
    logvar = ml[:, d_half:d_half + d_out]
    z = eps_p * jnp.exp(0.5 * ml[:, d_half:]) + ml[:, :d_half]
    d2 = elu(lin(z, w3, b3))
    d1 = elu(lin(d2, w4, b4))
    recon = lin(d1, w5, b5)
    return recon, mu, logvar


if __name__ == "__main__":
    # Shapes implied by the module: image-like input flattened to d_in.
    B, C, H, W = 2, 4, 16, 16
    d_in = C * H * W            # 1024
    h_dim1, h_dim2, d_out = 128, 64, 32

    key = jax.random.PRNGKey(0)
    k_x, k_eps, k_p = jax.random.split(key, 3)

    x = jax.random.normal(k_x, (B, C, H, W), dtype=jnp.float32)
    # TODO(synk): torch.randn_like happens inside forward(); the equivalent
    # Gaussian draw is done here with jax.random and passed into the kernel.
    eps = jax.random.normal(k_eps, (B, d_out), dtype=jnp.float32)
    params = make_params(k_p, d_in, h_dim1, h_dim2, d_out)

    fwd = jax.jit(functools.partial(vae_forward, d_in=d_in))
    recon, mu, logvar = fwd(x, eps, params)
    jax.block_until_ready((recon, mu, logvar))

    r_ref, mu_ref, lv_ref = vae_reference(x, eps, params, d_in)
    assert recon.shape == (B, d_in) and mu.shape == (B, d_out) and logvar.shape == (B, d_out)
    np.testing.assert_allclose(np.asarray(recon), np.asarray(r_ref), rtol=1e-3, atol=1e-3)
    np.testing.assert_allclose(np.asarray(mu), np.asarray(mu_ref), rtol=1e-3, atol=1e-3)
    np.testing.assert_allclose(np.asarray(logvar), np.asarray(lv_ref), rtol=1e-3, atol=1e-3)

    print("KERNEL_OK")
</pallas_src>

<mosaic_0001>
module attributes {stable_mosaic.version = 11 : i64} {
  func.func @vae_kernel(%arg0: i32, %arg1: memref<16x1024xbf16, #tpu.memory_space<vmem>>, %arg2: memref<16x64xf32, #tpu.memory_space<vmem>>, %arg3: memref<1024x128xbf16, #tpu.memory_space<vmem>>, %arg4: memref<1x128xf32, #tpu.memory_space<vmem>>, %arg5: memref<128x64xbf16, #tpu.memory_space<vmem>>, %arg6: memref<1x64xf32, #tpu.memory_space<vmem>>, %arg7: memref<64x128xbf16, #tpu.memory_space<vmem>>, %arg8: memref<1x128xf32, #tpu.memory_space<vmem>>, %arg9: memref<64x64xbf16, #tpu.memory_space<vmem>>, %arg10: memref<1x64xf32, #tpu.memory_space<vmem>>, %arg11: memref<64x128xbf16, #tpu.memory_space<vmem>>, %arg12: memref<1x128xf32, #tpu.memory_space<vmem>>, %arg13: memref<128x1024xbf16, #tpu.memory_space<vmem>>, %arg14: memref<1x1024xf32, #tpu.memory_space<vmem>>, %arg15: memref<16x1024xf32, #tpu.memory_space<vmem>>, %arg16: memref<16x128xf32, #tpu.memory_space<vmem>>) attributes {dimension_semantics = [#tpu.dimension_semantics<parallel>], iteration_bounds = array<i64: 1>, scalar_prefetch = 0 : i64, scratch_operands = 0 : i64, tpu.core_type = #tpu.core_type<tc>, window_params = [{transform_indices = @transform_0, window_bounds = array<i64: 16, 1024>}, {transform_indices = @transform_1, window_bounds = array<i64: 16, 64>}, {pipeline_mode = #tpu.pipeline_mode<synchronous>, transform_indices = @transform_2, window_bounds = array<i64: 1024, 128>}, {pipeline_mode = #tpu.pipeline_mode<synchronous>, transform_indices = @transform_3, window_bounds = array<i64: 1, 128>}, {pipeline_mode = #tpu.pipeline_mode<synchronous>, transform_indices = @transform_4, window_bounds = array<i64: 128, 64>}, {pipeline_mode = #tpu.pipeline_mode<synchronous>, transform_indices = @transform_5, window_bounds = array<i64: 1, 64>}, {pipeline_mode = #tpu.pipeline_mode<synchronous>, transform_indices = @transform_6, window_bounds = array<i64: 64, 128>}, {pipeline_mode = #tpu.pipeline_mode<synchronous>, transform_indices = @transform_7, window_bounds = array<i64: 1, 128>}, {pipeline_mode = #tpu.pipeline_mode<synchronous>, transform_indices = @transform_8, window_bounds = array<i64: 64, 64>}, {pipeline_mode = #tpu.pipeline_mode<synchronous>, transform_indices = @transform_9, window_bounds = array<i64: 1, 64>}, {pipeline_mode = #tpu.pipeline_mode<synchronous>, transform_indices = @transform_10, window_bounds = array<i64: 64, 128>}, {pipeline_mode = #tpu.pipeline_mode<synchronous>, transform_indices = @transform_11, window_bounds = array<i64: 1, 128>}, {pipeline_mode = #tpu.pipeline_mode<synchronous>, transform_indices = @transform_12, window_bounds = array<i64: 128, 1024>}, {pipeline_mode = #tpu.pipeline_mode<synchronous>, transform_indices = @transform_13, window_bounds = array<i64: 1, 1024>}, {transform_indices = @transform_14, window_bounds = array<i64: 16, 1024>}, {transform_indices = @transform_15, window_bounds = array<i64: 16, 128>}]} {
    %c0 = arith.constant 0 : index
    %c0_0 = arith.constant 0 : index
    %0 = vector.load %arg1[%c0, %c0_0] : memref<16x1024xbf16, #tpu.memory_space<vmem>>, vector<16x1024xbf16>
    %c0_1 = arith.constant 0 : index
    %c0_2 = arith.constant 0 : index
    %1 = vector.load %arg3[%c0_1, %c0_2] : memref<1024x128xbf16, #tpu.memory_space<vmem>>, vector<1024x128xbf16>
    %cst = arith.constant dense<0.000000e+00> : vector<16x128xf32>
    %2 = tpu.matmul %0, %1, %cst {dimension_numbers = #tpu.dot_dimension_numbers<[1], [0], [0], [1], [0, 0, 1, 1], [], []>} : vector<16x1024xbf16>, vector<1024x128xbf16>, vector<16x128xf32> -> vector<16x128xf32>
    %c0_3 = arith.constant 0 : index
    %c0_4 = arith.constant 0 : index
    %3 = vector.load %arg4[%c0_3, %c0_4] : memref<1x128xf32, #tpu.memory_space<vmem>>, vector<1x128xf32>
    %4 = vector.broadcast %3 : vector<1x128xf32> to vector<16x128xf32>
    %5 = arith.addf %2, %4 : vector<16x128xf32>
    %cst_5 = arith.constant 0.000000e+00 : f32
    %6 = vector.broadcast %cst_5 : f32 to vector<16x128xf32>
    %7 = arith.cmpf ogt, %5, %6 : vector<16x128xf32>
    %cst_6 = arith.constant 0.000000e+00 : f32
    %8 = vector.broadcast %cst_6 : f32 to vector<16x128xf32>
    %9 = arith.minimumf %5, %8 : vector<16x128xf32>
    %10 = math.exp %9 : vector<16x128xf32>
    %cst_7 = arith.constant 1.000000e+00 : f32
    %11 = vector.broadcast %cst_7 : f32 to vector<16x128xf32>
    %12 = arith.subf %10, %11 : vector<16x128xf32>
    %13 = arith.select %7, %5, %12 : vector<16x128xi1>, vector<16x128xf32>
    %14 = arith.truncf %13 : vector<16x128xf32> to vector<16x128xbf16>
    %c0_8 = arith.constant 0 : index
    %c0_9 = arith.constant 0 : index
    %15 = vector.load %arg5[%c0_8, %c0_9] : memref<128x64xbf16, #tpu.memory_space<vmem>>, vector<128x64xbf16>
    %cst_10 = arith.constant dense<0.000000e+00> : vector<16x64xf32>
    %16 = tpu.matmul %14, %15, %cst_10 {dimension_numbers = #tpu.dot_dimension_numbers<[1], [0], [0], [1], [0, 0, 1, 1], [], []>} : vector<16x128xbf16>, vector<128x64xbf16>, vector<16x64xf32> -> vector<16x64xf32>
    %c0_11 = arith.constant 0 : index
    %c0_12 = arith.constant 0 : index
    %17 = vector.load %arg6[%c0_11, %c0_12] : memref<1x64xf32, #tpu.memory_space<vmem>>, vector<1x64xf32>
    %18 = vector.broadcast %17 : vector<1x64xf32> to vector<16x64xf32>
    %19 = arith.addf %16, %18 : vector<16x64xf32>
    %cst_13 = arith.constant 0.000000e+00 : f32
    %20 = vector.broadcast %cst_13 : f32 to vector<16x64xf32>
    %21 = arith.cmpf ogt, %19, %20 : vector<16x64xf32>
    %cst_14 = arith.constant 0.000000e+00 : f32
    %22 = vector.broadcast %cst_14 : f32 to vector<16x64xf32>
    %23 = arith.minimumf %19, %22 : vector<16x64xf32>
    %24 = math.exp %23 : vector<16x64xf32>
    %cst_15 = arith.constant 1.000000e+00 : f32
    %25 = vector.broadcast %cst_15 : f32 to vector<16x64xf32>
    %26 = arith.subf %24, %25 : vector<16x64xf32>
    %27 = arith.select %21, %19, %26 : vector<16x64xi1>, vector<16x64xf32>
    %28 = arith.truncf %27 : vector<16x64xf32> to vector<16x64xbf16>
    %c0_16 = arith.constant 0 : index
    %c0_17 = arith.constant 0 : index
    %29 = vector.load %arg7[%c0_16, %c0_17] : memref<64x128xbf16, #tpu.memory_space<vmem>>, vector<64x128xbf16>
    %cst_18 = arith.constant dense<0.000000e+00> : vector<16x128xf32>
    %30 = tpu.matmul %28, %29, %cst_18 {dimension_numbers = #tpu.dot_dimension_numbers<[1], [0], [0], [1], [0, 0, 1, 1], [], []>} : vector<16x64xbf16>, vector<64x128xbf16>, vector<16x128xf32> -> vector<16x128xf32>
    %c0_19 = arith.constant 0 : index
    %c0_20 = arith.constant 0 : index
    %31 = vector.load %arg8[%c0_19, %c0_20] : memref<1x128xf32, #tpu.memory_space<vmem>>, vector<1x128xf32>
    %32 = vector.broadcast %31 : vector<1x128xf32> to vector<16x128xf32>
    %33 = arith.addf %30, %32 : vector<16x128xf32>
    %34 = vector.extract_strided_slice %33 {offsets = [0, 0], sizes = [16, 64], strides = [1, 1]} : vector<16x128xf32> to vector<16x64xf32>
    %35 = vector.extract_strided_slice %33 {offsets = [0, 64], sizes = [16, 64], strides = [1, 1]} : vector<16x128xf32> to vector<16x64xf32>
    %cst_21 = arith.constant 5.000000e-01 : f32
    %36 = vector.broadcast %cst_21 : f32 to vector<16x64xf32>
    %37 = arith.mulf %36, %35 : vector<16x64xf32>
    %38 = math.exp %37 : vector<16x64xf32>
    %c0_22 = arith.constant 0 : index
    %c0_23 = arith.constant 0 : index
    %39 = vector.load %arg2[%c0_22, %c0_23] : memref<16x64xf32, #tpu.memory_space<vmem>>, vector<16x64xf32>
    %40 = arith.mulf %39, %38 : vector<16x64xf32>
    %41 = arith.addf %40, %34 : vector<16x64xf32>
    %42 = arith.truncf %41 : vector<16x64xf32> to vector<16x64xbf16>
    %c0_24 = arith.constant 0 : index
    %c0_25 = arith.constant 0 : index
    %43 = vector.load %arg9[%c0_24, %c0_25] : memref<64x64xbf16, #tpu.memory_space<vmem>>, vector<64x64xbf16>
    %cst_26 = arith.constant dense<0.000000e+00> : vector<16x64xf32>
    %44 = tpu.matmul %42, %43, %cst_26 {dimension_numbers = #tpu.dot_dimension_numbers<[1], [0], [0], [1], [0, 0, 1, 1], [], []>} : vector<16x64xbf16>, vector<64x64xbf16>, vector<16x64xf32> -> vector<16x64xf32>
    %c0_27 = arith.constant 0 : index
    %c0_28 = arith.constant 0 : index
    %45 = vector.load %arg10[%c0_27, %c0_28] : memref<1x64xf32, #tpu.memory_space<vmem>>, vector<1x64xf32>
    %46 = vector.broadcast %45 : vector<1x64xf32> to vector<16x64xf32>
    %47 = arith.addf %44, %46 : vector<16x64xf32>
    %cst_29 = arith.constant 0.000000e+00 : f32
    %48 = vector.broadcast %cst_29 : f32 to vector<16x64xf32>
    %49 = arith.cmpf ogt, %47, %48 : vector<16x64xf32>
    %cst_30 = arith.constant 0.000000e+00 : f32
    %50 = vector.broadcast %cst_30 : f32 to vector<16x64xf32>
    %51 = arith.minimumf %47, %50 : vector<16x64xf32>
    %52 = math.exp %51 : vector<16x64xf32>
    %cst_31 = arith.constant 1.000000e+00 : f32
    %53 = vector.broadcast %cst_31 : f32 to vector<16x64xf32>
    %54 = arith.subf %52, %53 : vector<16x64xf32>
    %55 = arith.select %49, %47, %54 : vector<16x64xi1>, vector<16x64xf32>
    %56 = arith.truncf %55 : vector<16x64xf32> to vector<16x64xbf16>
    %c0_32 = arith.constant 0 : index
    %c0_33 = arith.constant 0 : index
    %57 = vector.load %arg11[%c0_32, %c0_33] : memref<64x128xbf16, #tpu.memory_space<vmem>>, vector<64x128xbf16>
    %cst_34 = arith.constant dense<0.000000e+00> : vector<16x128xf32>
    %58 = tpu.matmul %56, %57, %cst_34 {dimension_numbers = #tpu.dot_dimension_numbers<[1], [0], [0], [1], [0, 0, 1, 1], [], []>} : vector<16x64xbf16>, vector<64x128xbf16>, vector<16x128xf32> -> vector<16x128xf32>
    %c0_35 = arith.constant 0 : index
    %c0_36 = arith.constant 0 : index
    %59 = vector.load %arg12[%c0_35, %c0_36] : memref<1x128xf32, #tpu.memory_space<vmem>>, vector<1x128xf32>
    %60 = vector.broadcast %59 : vector<1x128xf32> to vector<16x128xf32>
    %61 = arith.addf %58, %60 : vector<16x128xf32>
    %cst_37 = arith.constant 0.000000e+00 : f32
    %62 = vector.broadcast %cst_37 : f32 to vector<16x128xf32>
    %63 = arith.cmpf ogt, %61, %62 : vector<16x128xf32>
    %cst_38 = arith.constant 0.000000e+00 : f32
    %64 = vector.broadcast %cst_38 : f32 to vector<16x128xf32>
    %65 = arith.minimumf %61, %64 : vector<16x128xf32>
    %66 = math.exp %65 : vector<16x128xf32>
    %cst_39 = arith.constant 1.000000e+00 : f32
    %67 = vector.broadcast %cst_39 : f32 to vector<16x128xf32>
    %68 = arith.subf %66, %67 : vector<16x128xf32>
    %69 = arith.select %63, %61, %68 : vector<16x128xi1>, vector<16x128xf32>
    %70 = arith.truncf %69 : vector<16x128xf32> to vector<16x128xbf16>
    %c0_40 = arith.constant 0 : index
    %c0_41 = arith.constant 0 : index
    %71 = vector.load %arg13[%c0_40, %c0_41] : memref<128x1024xbf16, #tpu.memory_space<vmem>>, vector<128x1024xbf16>
    %cst_42 = arith.constant dense<0.000000e+00> : vector<16x1024xf32>
    %72 = tpu.matmul %70, %71, %cst_42 {dimension_numbers = #tpu.dot_dimension_numbers<[1], [0], [0], [1], [0, 0, 1, 1], [], []>} : vector<16x128xbf16>, vector<128x1024xbf16>, vector<16x1024xf32> -> vector<16x1024xf32>
    %c0_43 = arith.constant 0 : index
    %c0_44 = arith.constant 0 : index
    %73 = vector.load %arg14[%c0_43, %c0_44] : memref<1x1024xf32, #tpu.memory_space<vmem>>, vector<1x1024xf32>
    %74 = vector.broadcast %73 : vector<1x1024xf32> to vector<16x1024xf32>
    %75 = arith.addf %72, %74 : vector<16x1024xf32>
    %c0_45 = arith.constant 0 : index
    %c0_46 = arith.constant 0 : index
    %76 = vector.load %arg15[%c0_45, %c0_46] : memref<16x1024xf32, #tpu.memory_space<vmem>>, vector<16x1024xf32>
    tpu.vector_store %arg15[%c0_45, %c0_46], %75 {strides = array<i32>} : memref<16x1024xf32, #tpu.memory_space<vmem>>, vector<16x1024xf32>,
    %c0_47 = arith.constant 0 : index
    %c0_48 = arith.constant 0 : index
    %77 = vector.load %arg16[%c0_47, %c0_48] : memref<16x128xf32, #tpu.memory_space<vmem>>, vector<16x128xf32>
    tpu.vector_store %arg16[%c0_47, %c0_48], %33 {strides = array<i32>} : memref<16x128xf32, #tpu.memory_space<vmem>>, vector<16x128xf32>,
    return
  }
  func.func @transform_0(%arg0: i32) -> (i32, i32) {
    %c0_i32 = arith.constant 0 : i32
    %c0_i32_0 = arith.constant 0 : i32
    return %arg0, %c0_i32 : i32, i32
  }
  func.func @transform_1(%arg0: i32) -> (i32, i32) {
    %c0_i32 = arith.constant 0 : i32
    %c0_i32_0 = arith.constant 0 : i32
    return %arg0, %c0_i32 : i32, i32
  }
  func.func @transform_2(%arg0: i32) -> (i32, i32) {
    %c0_i32 = arith.constant 0 : i32
    %c0_i32_0 = arith.constant 0 : i32
    %c0_i32_1 = arith.constant 0 : i32
    return %c0_i32, %c0_i32_0 : i32, i32
  }
  func.func @transform_3(%arg0: i32) -> (i32, i32) {
    %c0_i32 = arith.constant 0 : i32
    %c0_i32_0 = arith.constant 0 : i32
    %c0_i32_1 = arith.constant 0 : i32
    return %c0_i32, %c0_i32_0 : i32, i32
  }
  func.func @transform_4(%arg0: i32) -> (i32, i32) {
    %c0_i32 = arith.constant 0 : i32
    %c0_i32_0 = arith.constant 0 : i32
    %c0_i32_1 = arith.constant 0 : i32
    return %c0_i32, %c0_i32_0 : i32, i32
  }
  func.func @transform_5(%arg0: i32) -> (i32, i32) {
    %c0_i32 = arith.constant 0 : i32
    %c0_i32_0 = arith.constant 0 : i32
    %c0_i32_1 = arith.constant 0 : i32
    return %c0_i32, %c0_i32_0 : i32, i32
  }
  func.func @transform_6(%arg0: i32) -> (i32, i32) {
    %c0_i32 = arith.constant 0 : i32
    %c0_i32_0 = arith.constant 0 : i32
    %c0_i32_1 = arith.constant 0 : i32
    return %c0_i32, %c0_i32_0 : i32, i32
  }
  func.func @transform_7(%arg0: i32) -> (i32, i32) {
    %c0_i32 = arith.constant 0 : i32
    %c0_i32_0 = arith.constant 0 : i32
    %c0_i32_1 = arith.constant 0 : i32
    return %c0_i32, %c0_i32_0 : i32, i32
  }
  func.func @transform_8(%arg0: i32) -> (i32, i32) {
    %c0_i32 = arith.constant 0 : i32
    %c0_i32_0 = arith.constant 0 : i32
    %c0_i32_1 = arith.constant 0 : i32
    return %c0_i32, %c0_i32_0 : i32, i32
  }
  func.func @transform_9(%arg0: i32) -> (i32, i32) {
    %c0_i32 = arith.constant 0 : i32
    %c0_i32_0 = arith.constant 0 : i32
    %c0_i32_1 = arith.constant 0 : i32
    return %c0_i32, %c0_i32_0 : i32, i32
  }
  func.func @transform_10(%arg0: i32) -> (i32, i32) {
    %c0_i32 = arith.constant 0 : i32
    %c0_i32_0 = arith.constant 0 : i32
    %c0_i32_1 = arith.constant 0 : i32
    return %c0_i32, %c0_i32_0 : i32, i32
  }
  func.func @transform_11(%arg0: i32) -> (i32, i32) {
    %c0_i32 = arith.constant 0 : i32
    %c0_i32_0 = arith.constant 0 : i32
    %c0_i32_1 = arith.constant 0 : i32
    return %c0_i32, %c0_i32_0 : i32, i32
  }
  func.func @transform_12(%arg0: i32) -> (i32, i32) {
    %c0_i32 = arith.constant 0 : i32
    %c0_i32_0 = arith.constant 0 : i32
    %c0_i32_1 = arith.constant 0 : i32
    return %c0_i32, %c0_i32_0 : i32, i32
  }
  func.func @transform_13(%arg0: i32) -> (i32, i32) {
    %c0_i32 = arith.constant 0 : i32
    %c0_i32_0 = arith.constant 0 : i32
    %c0_i32_1 = arith.constant 0 : i32
    return %c0_i32, %c0_i32_0 : i32, i32
  }
  func.func @transform_14(%arg0: i32) -> (i32, i32) {
    %c0_i32 = arith.constant 0 : i32
    %c0_i32_0 = arith.constant 0 : i32
    return %arg0, %c0_i32 : i32, i32
  }
  func.func @transform_15(%arg0: i32) -> (i32, i32) {
    %c0_i32 = arith.constant 0 : i32
    %c0_i32_0 = arith.constant 0 : i32
    return %arg0, %c0_i32 : i32, i32
  }
}

</mosaic_0001>

<llo_original>
// kernel: vae_forward.1
$region0: #{vae_forward.1}
  #allocation0 [shape = 'u32[]', space=smem, size = 0x4, offset = 0x4, fixed_abs, tag = 'smem constant byte address 0x4 - core index']
  #allocation1 [shape = 'u32[144,128]{1,0:T(1,128)}', space=vmem, size = 0x12000, scoped, tag = 'internal scratch']
  %s0 = inlined_call_operand.vmem [shape: bf16[16,1024], index: 0, kind: input, shape index: {}]
  %s1 = inlined_call_operand.vmem [shape: f32[16,64], index: 1, kind: input, shape index: {}]
  %s2 = inlined_call_operand.hbm [shape: bf16[1024,128], index: 2, kind: input, shape index: {}]
  %s3 = inlined_call_operand.vmem [shape: f32[1,128], index: 3, kind: input, shape index: {}]
  %s4 = inlined_call_operand.vmem [shape: bf16[128,64], index: 4, kind: input, shape index: {}]
  %s5 = inlined_call_operand.vmem [shape: f32[1,64], index: 5, kind: input, shape index: {}]
  %s6 = inlined_call_operand.vmem [shape: bf16[64,128], index: 6, kind: input, shape index: {}]
  %s7 = inlined_call_operand.vmem [shape: f32[1,128], index: 7, kind: input, shape index: {}]
  %s8 = inlined_call_operand.vmem [shape: bf16[64,64], index: 8, kind: input, shape index: {}]
  %s9 = inlined_call_operand.vmem [shape: f32[1,64], index: 9, kind: input, shape index: {}]
  %s10 = inlined_call_operand.vmem [shape: bf16[64,128], index: 10, kind: input, shape index: {}]
  %s11 = inlined_call_operand.vmem [shape: f32[1,128], index: 11, kind: input, shape index: {}]
  %s12 = inlined_call_operand.hbm [shape: bf16[128,1024], index: 12, kind: input, shape index: {}]
  %s13 = inlined_call_operand.vmem [shape: f32[1,1024], index: 13, kind: input, shape index: {}]
  %s14 = inlined_call_operand.vmem [shape: f32[16,1024], index: 14, kind: output, shape index: {0}]
  %s15 = inlined_call_operand.vmem [shape: f32[16,128], index: 15, kind: output, shape index: {1}]
  %16 = xla_tuple %s14, %s15
  %s17 = sld [smem:[#allocation0]]
  $region82: #{vae_forward.1} parent=0
    _
  %s19 = ssub.s32 1, %s17
  %s20 = scalar_select 0, %s19, %s17
  $region1: #{vae_forward.1} parent=0
    #allocation2 [shape = 'u8[262144]{0}', space=vmem, size = 0x40000, scoped, tag = 'input window, operand 2, single buffered']
    #allocation3 [shape = 's32[1]{0}', space=sflag, size = 0x4, scoped, tag = 'scoped memory for vae_forward.1']
    #allocation4 [shape = 'u8[262144]{0}', space=vmem, size = 0x40000, scoped, tag = 'input window, operand 12, single buffered']
    #allocation5 [shape = 's32[1]{0}', space=sflag, size = 0x4, scoped, tag = 'scoped memory for vae_forward.1']
    %21 = vsyncpa [#allocation3], 0
    %22 = vsyncpa [#allocation5], 0
    // Predicated region
    $region2: #{vae_forward.1} parent=1 // pred_check
      _
    $region3: #{vae_forward.1} parent=1 // pred_check_branch
      %24 = sbr.rel (0) target = $region5
    $region4: #{vae_forward.1} parent=1 // pred_region
      _
    $region5: #{vae_forward.1} parent=1 // pred_fallthru
      _
    // Predicated region
    $region6: #{vae_forward.1} parent=1 // pred_check
      _
    $region7: #{vae_forward.1} parent=1 // pred_check_branch
      %26 = sbr.rel (0) target = $region9
    $region8: #{vae_forward.1} parent=1 // pred_region
      _
    $region9: #{vae_forward.1} parent=1 // pred_fallthru
      _
    // Predicated region
    $region10: #{vae_forward.1} parent=1 // pred_check
      _
    $region11: #{vae_forward.1} parent=1 // pred_check_branch
      %28 = sbr.rel (0) target = $region13
    $region12: #{vae_forward.1} parent=1 // pred_region
      %s30 = ssub.s32 8192, 8192
      %31 = vsyncadd [#allocation3], %s30
      %s32 = sshll.u32 [#allocation2], 4
      %s33 = int_to_ptr.vmem [resolvable:$true] %s32
      %38 = dma.hbm_to_vmem [thread:$0]  %s2, 8192, %s33, [#allocation3], 64, 64, 4
    $region13: #{vae_forward.1} parent=1 // pred_fallthru
      _
    // Predicated region
    $region14: #{vae_forward.1} parent=1 // pred_check
      _
    $region15: #{vae_forward.1} parent=1 // pred_check_branch
      %40 = sbr.rel (0) target = $region17
    $region16: #{vae_forward.1} parent=1 // pred_region
      _
    $region17: #{vae_forward.1} parent=1 // pred_fallthru
      _
    // Predicated region
    $region18: #{vae_forward.1} parent=1 // pred_check
      _
    $region19: #{vae_forward.1} parent=1 // pred_check_branch
      %42 = sbr.rel (0) target = $region21
    $region20: #{vae_forward.1} parent=1 // pred_region
      _
    $region21: #{vae_forward.1} parent=1 // pred_fallthru
      _
    // Predicated region
    $region22: #{vae_forward.1} parent=1 // pred_check
      _
    $region23: #{vae_forward.1} parent=1 // pred_check_branch
      %44 = sbr.rel (0) target = $region25
    $region24: #{vae_forward.1} parent=1 // pred_region
      _
    $region25: #{vae_forward.1} parent=1 // pred_fallthru
      _
    // Predicated region
    $region26: #{vae_forward.1} parent=1 // pred_check
      _
    $region27: #{vae_forward.1} parent=1 // pred_check_branch
      %46 = sbr.rel (0) target = $region29
    $region28: #{vae_forward.1} parent=1 // pred_region
      _
    $region29: #{vae_forward.1} parent=1 // pred_fallthru
      _
    // Predicated region
    $region30: #{vae_forward.1} parent=1 // pred_check
      _
    $region31: #{vae_forward.1} parent=1 // pred_check_branch
      %48 = sbr.rel (0) target = $region33
    $region32: #{vae_forward.1} parent=1 // pred_region
      _
    $region33: #{vae_forward.1} parent=1 // pred_fallthru
      _
    // Predicated region
    $region34: #{vae_forward.1} parent=1 // pred_check
      _
    $region35: #{vae_forward.1} parent=1 // pred_check_branch
      %50 = sbr.rel (0) target = $region37
    $region36: #{vae_forward.1} parent=1 // pred_region
      _
    $region37: #{vae_forward.1} parent=1 // pred_fallthru
      _
    // Predicated region
    $region38: #{vae_forward.1} parent=1 // pred_check
      _
    $region39: #{vae_forward.1} parent=1 // pred_check_branch
      %52 = sbr.rel (0) target = $region41
    $region40: #{vae_forward.1} parent=1 // pred_region
      _
    $region41: #{vae_forward.1} parent=1 // pred_fallthru
      _
    // Predicated region
    $region42: #{vae_forward.1} parent=1 // pred_check
      _
    $region43: #{vae_forward.1} parent=1 // pred_check_branch
      %54 = sbr.rel (0) target = $region45
    $region44: #{vae_forward.1} parent=1 // pred_region
      _
    $region45: #{vae_forward.1} parent=1 // pred_fallthru
      _
    // Predicated region
    $region46: #{vae_forward.1} parent=1 // pred_check
      _
    $region47: #{vae_forward.1} parent=1 // pred_check_branch
      %56 = sbr.rel (0) target = $region49
    $region48: #{vae_forward.1} parent=1 // pred_region
      _
    $region49: #{vae_forward.1} parent=1 // pred_fallthru
      _
    // Predicated region
    $region50: #{vae_forward.1} parent=1 // pred_check
      _
    $region51: #{vae_forward.1} parent=1 // pred_check_branch
      %58 = sbr.rel (0) target = $region53
    $region52: #{vae_forward.1} parent=1 // pred_region
      %s60 = ssub.s32 8192, 8192
      %61 = vsyncadd [#allocation5], %s60
      %s62 = sshll.u32 [#allocation4], 4
      %s63 = int_to_ptr.vmem [resolvable:$true] %s62
      %68 = dma.hbm_to_vmem [thread:$0]  %s12, 8192, %s63, [#allocation5], 512, 512, 32
    $region53: #{vae_forward.1} parent=1 // pred_fallthru
      _
    // Predicated region
    $region54: #{vae_forward.1} parent=1 // pred_check
      _
    $region55: #{vae_forward.1} parent=1 // pred_check_branch
      %70 = sbr.rel (0) target = $region57
    $region56: #{vae_forward.1} parent=1 // pred_region
      _
    $region57: #{vae_forward.1} parent=1 // pred_fallthru
      _
    // Predicated region
    $region58: #{vae_forward.1} parent=1 // pred_check
      _
    $region59: #{vae_forward.1} parent=1 // pred_check_branch
      %72 = sbr.rel (0) target = $region61
    $region60: #{vae_forward.1} parent=1 // pred_region
      %73 = dma.done [#allocation3], 8192
    $region61: #{vae_forward.1} parent=1 // pred_fallthru
      _
    // Predicated region
    $region62: #{vae_forward.1} parent=1 // pred_check
      _
    $region63: #{vae_forward.1} parent=1 // pred_check_branch
      %75 = sbr.rel (0) target = $region65
    $region64: #{vae_forward.1} parent=1 // pred_region
      %76 = dma.done [#allocation5], 8192
    $region65: #{vae_forward.1} parent=1 // pred_fallthru
      _
    %v78 = vld [vmem:[%s0] sm:$0xff]
    %v79 = vld [vmem:[%s0 + $0x8] sm:$0xff]
    %v80 = vld [vmem:[%s0 + $0x10] sm:$0xff]
    %v81 = vld [vmem:[%s0 + $0x18] sm:$0xff]
    %v82 = vld [vmem:[%s0 + $0x20] sm:$0xff]
    %v83 = vld [vmem:[%s0 + $0x28] sm:$0xff]
    %v84 = vld [vmem:[%s0 + $0x30] sm:$0xff]
    %v85 = vld [vmem:[%s0 + $0x38] sm:$0xff]
    %v86 = vld [vmem:[#allocation2] sm:$0xf]
    %v87 = vld [vmem:[#allocation2 + $0x4] sm:$0xf]
    %v88 = vld [vmem:[#allocation2 + $0x8] sm:$0xf]
    %v89 = vld [vmem:[#allocation2 + $0xc] sm:$0xf]
    %v90 = vld [vmem:[#allocation2 + $0x10] sm:$0xf]
    %v91 = vld [vmem:[#allocation2 + $0x14] sm:$0xf]
    %v92 = vld [vmem:[#allocation2 + $0x18] sm:$0xf]
    %v93 = vld [vmem:[#allocation2 + $0x1c] sm:$0xf]
    %v94 = vld [vmem:[#allocation2 + $0x20] sm:$0xf]
    %v95 = vld [vmem:[#allocation2 + $0x24] sm:$0xf]
    %v96 = vld [vmem:[#allocation2 + $0x28] sm:$0xf]
    %v97 = vld [vmem:[#allocation2 + $0x2c] sm:$0xf]
    %v98 = vld [vmem:[#allocation2 + $0x30] sm:$0xf]
    %v99 = vld [vmem:[#allocation2 + $0x34] sm:$0xf]
    %v100 = vld [vmem:[#allocation2 + $0x38] sm:$0xf]
    %v101 = vld [vmem:[#allocation2 + $0x3c] sm:$0xf]
    %v102 = vld [vmem:[#allocation2 + $0x40] sm:$0xf]
    %v103 = vld [vmem:[#allocation2 + $0x44] sm:$0xf]
    %v104 = vld [vmem:[#allocation2 + $0x48] sm:$0xf]
    %v105 = vld [vmem:[#allocation2 + $0x4c] sm:$0xf]
    %v106 = vld [vmem:[#allocation2 + $0x50] sm:$0xf]
    %v107 = vld [vmem:[#allocation2 + $0x54] sm:$0xf]
    %v108 = vld [vmem:[#allocation2 + $0x58] sm:$0xf]
    %v109 = vld [vmem:[#allocation2 + $0x5c] sm:$0xf]
    %v110 = vld [vmem:[#allocation2 + $0x60] sm:$0xf]
    %v111 = vld [vmem:[#allocation2 + $0x64] sm:$0xf]
    %v112 = vld [vmem:[#allocation2 + $0x68] sm:$0xf]
    %v113 = vld [vmem:[#allocation2 + $0x6c] sm:$0xf]
    %v114 = vld [vmem:[#allocation2 + $0x70] sm:$0xf]
    %v115 = vld [vmem:[#allocation2 + $0x74] sm:$0xf]
    %v116 = vld [vmem:[#allocation2 + $0x78] sm:$0xf]
    %v117 = vld [vmem:[#allocation2 + $0x7c] sm:$0xf]
    %v118 = vld [vmem:[#allocation2 + $0x80] sm:$0xf]
    %v119 = vld [vmem:[#allocation2 + $0x84] sm:$0xf]
    %v120 = vld [vmem:[#allocation2 + $0x88] sm:$0xf]
    %v121 = vld [vmem:[#allocation2 + $0x8c] sm:$0xf]
    %v122 = vld [vmem:[#allocation2 + $0x90] sm:$0xf]
    %v123 = vld [vmem:[#allocation2 + $0x94] sm:$0xf]
    %v124 = vld [vmem:[#allocation2 + $0x98] sm:$0xf]
    %v125 = vld [vmem:[#allocation2 + $0x9c] sm:$0xf]
    %v126 = vld [vmem:[#allocation2 + $0xa0] sm:$0xf]
    %v127 = vld [vmem:[#allocation2 + $0xa4] sm:$0xf]
    %v128 = vld [vmem:[#allocation2 + $0xa8] sm:$0xf]
    %v129 = vld [vmem:[#allocation2 + $0xac] sm:$0xf]
    %v130 = vld [vmem:[#allocation2 + $0xb0] sm:$0xf]
    %v131 = vld [vmem:[#allocation2 + $0xb4] sm:$0xf]
    %v132 = vld [vmem:[#allocation2 + $0xb8] sm:$0xf]
    %v133 = vld [vmem:[#allocation2 + $0xbc] sm:$0xf]
    %v134 = vld [vmem:[#allocation2 + $0xc0] sm:$0xf]
    %v135 = vld [vmem:[#allocation2 + $0xc4] sm:$0xf]
    %v136 = vld [vmem:[#allocation2 + $0xc8] sm:$0xf]
    %v137 = vld [vmem:[#allocation2 + $0xcc] sm:$0xf]
    %v138 = vld [vmem:[#allocation2 + $0xd0] sm:$0xf]
    %v139 = vld [vmem:[#allocation2 + $0xd4] sm:$0xf]
    %v140 = vld [vmem:[#allocation2 + $0xd8] sm:$0xf]
    %v141 = vld [vmem:[#allocation2 + $0xdc] sm:$0xf]
    %v142 = vld [vmem:[#allocation2 + $0xe0] sm:$0xf]
    %v143 = vld [vmem:[#allocation2 + $0xe4] sm:$0xf]
    %v144 = vld [vmem:[#allocation2 + $0xe8] sm:$0xf]
    %v145 = vld [vmem:[#allocation2 + $0xec] sm:$0xf]
    %v146 = vld [vmem:[#allocation2 + $0xf0] sm:$0xf]
    %v147 = vld [vmem:[#allocation2 + $0xf4] sm:$0xf]
    %v148 = vld [vmem:[#allocation2 + $0xf8] sm:$0xf]
    %v149 = vld [vmem:[#allocation2 + $0xfc] sm:$0xf]
    %v150 = vld [vmem:[#allocation2 + $0x100] sm:$0xf]
    %v151 = vld [vmem:[#allocation2 + $0x104] sm:$0xf]
    %v152 = vld [vmem:[#allocation2 + $0x108] sm:$0xf]
    %v153 = vld [vmem:[#allocation2 + $0x10c] sm:$0xf]
    %v154 = vld [vmem:[#allocation2 + $0x110] sm:$0xf]
    %v155 = vld [vmem:[#allocation2 + $0x114] sm:$0xf]
    %v156 = vld [vmem:[#allocation2 + $0x118] sm:$0xf]
    %v157 = vld [vmem:[#allocation2 + $0x11c] sm:$0xf]
    %v158 = vld [vmem:[#allocation2 + $0x120] sm:$0xf]
    %v159 = vld [vmem:[#allocation2 + $0x124] sm:$0xf]
    %v160 = vld [vmem:[#allocation2 + $0x128] sm:$0xf]
    %v161 = vld [vmem:[#allocation2 + $0x12c] sm:$0xf]
    %v162 = vld [vmem:[#allocation2 + $0x130] sm:$0xf]
    %v163 = vld [vmem:[#allocation2 + $0x134] sm:$0xf]
    %v164 = vld [vmem:[#allocation2 + $0x138] sm:$0xf]
    %v165 = vld [vmem:[#allocation2 + $0x13c] sm:$0xf]
    %v166 = vld [vmem:[#allocation2 + $0x140] sm:$0xf]
    %v167 = vld [vmem:[#allocation2 + $0x144] sm:$0xf]
    %v168 = vld [vmem:[#allocation2 + $0x148] sm:$0xf]
    %v169 = vld [vmem:[#allocation2 + $0x14c] sm:$0xf]
    %v170 = vld [vmem:[#allocation2 + $0x150] sm:$0xf]
    %v171 = vld [vmem:[#allocation2 + $0x154] sm:$0xf]
    %v172 = vld [vmem:[#allocation2 + $0x158] sm:$0xf]
    %v173 = vld [vmem:[#allocation2 + $0x15c] sm:$0xf]
    %v174 = vld [vmem:[#allocation2 + $0x160] sm:$0xf]
    %v175 = vld [vmem:[#allocation2 + $0x164] sm:$0xf]
    %v176 = vld [vmem:[#allocation2 + $0x168] sm:$0xf]
    %v177 = vld [vmem:[#allocation2 + $0x16c] sm:$0xf]
    %v178 = vld [vmem:[#allocation2 + $0x170] sm:$0xf]
    %v179 = vld [vmem:[#allocation2 + $0x174] sm:$0xf]
    %v180 = vld [vmem:[#allocation2 + $0x178] sm:$0xf]
    %v181 = vld [vmem:[#allocation2 + $0x17c] sm:$0xf]
    %v182 = vld [vmem:[#allocation2 + $0x180] sm:$0xf]
    %v183 = vld [vmem:[#allocation2 + $0x184] sm:$0xf]
    %v184 = vld [vmem:[#allocation2 + $0x188] sm:$0xf]
    %v185 = vld [vmem:[#allocation2 + $0x18c] sm:$0xf]
    %v186 = vld [vmem:[#allocation2 + $0x190] sm:$0xf]
    %v187 = vld [vmem:[#allocation2 + $0x194] sm:$0xf]
    %v188 = vld [vmem:[#allocation2 + $0x198] sm:$0xf]
    %v189 = vld [vmem:[#allocation2 + $0x19c] sm:$0xf]
    %v190 = vld [vmem:[#allocation2 + $0x1a0] sm:$0xf]
    %v191 = vld [vmem:[#allocation2 + $0x1a4] sm:$0xf]
    %v192 = vld [vmem:[#allocation2 + $0x1a8] sm:$0xf]
    %v193 = vld [vmem:[#allocation2 + $0x1ac] sm:$0xf]
    %v194 = vld [vmem:[#allocation2 + $0x1b0] sm:$0xf]
    %v195 = vld [vmem:[#allocation2 + $0x1b4] sm:$0xf]
    %v196 = vld [vmem:[#allocation2 + $0x1b8] sm:$0xf]
    %v197 = vld [vmem:[#allocation2 + $0x1bc] sm:$0xf]
    %v198 = vld [vmem:[#allocation2 + $0x1c0] sm:$0xf]
    %v199 = vld [vmem:[#allocation2 + $0x1c4] sm:$0xf]
    %v200 = vld [vmem:[#allocation2 + $0x1c8] sm:$0xf]
    %v201 = vld [vmem:[#allocation2 + $0x1cc] sm:$0xf]
    %v202 = vld [vmem:[#allocation2 + $0x1d0] sm:$0xf]
    %v203 = vld [vmem:[#allocation2 + $0x1d4] sm:$0xf]
    %v204 = vld [vmem:[#allocation2 + $0x1d8] sm:$0xf]
    %v205 = vld [vmem:[#allocation2 + $0x1dc] sm:$0xf]
    %v206 = vld [vmem:[#allocation2 + $0x1e0] sm:$0xf]
    %v207 = vld [vmem:[#allocation2 + $0x1e4] sm:$0xf]
    %v208 = vld [vmem:[#allocation2 + $0x1e8] sm:$0xf]
    %v209 = vld [vmem:[#allocation2 + $0x1ec] sm:$0xf]
    %v210 = vld [vmem:[#allocation2 + $0x1f0] sm:$0xf]
    %v211 = vld [vmem:[#allocation2 + $0x1f4] sm:$0xf]
    %v212 = vld [vmem:[#allocation2 + $0x1f8] sm:$0xf]
    %v213 = vld [vmem:[#allocation2 + $0x1fc] sm:$0xf]
    %v214 = vld [vmem:[%s3] sm:$0x1]
    %v216 = vlaneseq
    %v217 = vshrl.u32 %v216, 7
    %v218 = vsub.s32 0, %v217
    %v219 = vrot.slane %v214, %v218
    %v229 = vunpack.c.l.b16 %v78
    %v230 = vunpack.c.h.b16 %v78
    %v231 = vunpack.c.l.b16 %v79
    %v232 = vunpack.c.h.b16 %v79
    %v233 = vunpack.c.l.b16 %v80
    %v234 = vunpack.c.h.b16 %v80
    %v235 = vunpack.c.l.b16 %v81
    %v236 = vunpack.c.h.b16 %v81
    %v237 = vunpack.c.l.b16 %v82
    %v238 = vunpack.c.h.b16 %v82
    %v239 = vunpack.c.l.b16 %v83
    %v240 = vunpack.c.h.b16 %v83
    %v241 = vunpack.c.l.b16 %v84
    %v242 = vunpack.c.h.b16 %v84
    %v243 = vunpack.c.l.b16 %v85
    %v244 = vunpack.c.h.b16 %v85
    %v245 = vpack.c.b16 %v237, %v229
    %v246 = vpack.c.b16 %v238, %v230
    %v247 = vpack.c.b16 %v239, %v231
    %v248 = vpack.c.b16 %v240, %v232
    %v249 = vpack.c.b16 %v241, %v233
    %v250 = vpack.c.b16 %v242, %v234
    %v251 = vpack.c.b16 %v243, %v235
    %v252 = vpack.c.b16 %v244, %v236
    %v389 = vunpack.c.l.b16 %v86
    %v390 = vunpack.c.l.b16 %v87
    %v391 = vunpack.c.l.b16 %v88
    %v392 = vunpack.c.l.b16 %v89
    %v393 = vunpack.c.l.b16 %v90
    %v394 = vunpack.c.l.b16 %v91
    %v395 = vunpack.c.l.b16 %v92
    %v396 = vunpack.c.l.b16 %v93
    %v397 = vunpack.c.l.b16 %v94
    %v398 = vunpack.c.l.b16 %v95
    %v399 = vunpack.c.l.b16 %v96
    %v400 = vunpack.c.l.b16 %v97
    %v401 = vunpack.c.l.b16 %v98
    %v402 = vunpack.c.l.b16 %v99
    %v403 = vunpack.c.l.b16 %v100
    %v404 = vunpack.c.l.b16 %v101
    %v405 = vunpack.c.l.b16 %v102
    %v406 = vunpack.c.l.b16 %v103
    %v407 = vunpack.c.l.b16 %v104
    %v408 = vunpack.c.l.b16 %v105
    %v409 = vunpack.c.l.b16 %v106
    %v410 = vunpack.c.l.b16 %v107
    %v411 = vunpack.c.l.b16 %v108
    %v412 = vunpack.c.l.b16 %v109
    %v413 = vunpack.c.l.b16 %v110
    %v414 = vunpack.c.l.b16 %v111
    %v415 = vunpack.c.l.b16 %v112
    %v416 = vunpack.c.l.b16 %v113
    %v417 = vunpack.c.l.b16 %v114
    %v418 = vunpack.c.l.b16 %v115
    %v419 = vunpack.c.l.b16 %v116
    %v420 = vunpack.c.l.b16 %v117
    %v421 = vunpack.c.l.b16 %v118
    %v422 = vunpack.c.l.b16 %v119
    %v423 = vunpack.c.l.b16 %v120
    %v424 = vunpack.c.l.b16 %v121
    %v425 = vunpack.c.l.b16 %v122
    %v426 = vunpack.c.l.b16 %v123
    %v427 = vunpack.c.l.b16 %v124
    %v428 = vunpack.c.l.b16 %v125
    %v429 = vunpack.c.l.b16 %v126
    %v430 = vunpack.c.l.b16 %v127
    %v431 = vunpack.c.l.b16 %v128
    %v432 = vunpack.c.l.b16 %v129
    %v433 = vunpack.c.l.b16 %v130
    %v434 = vunpack.c.l.b16 %v131
    %v435 = vunpack.c.l.b16 %v132
    %v436 = vunpack.c.l.b16 %v133
    %v437 = vunpack.c.l.b16 %v134
    %v438 = vunpack.c.l.b16 %v135
    %v439 = vunpack.c.l.b16 %v136
    %v440 = vunpack.c.l.b16 %v137
    %v441 = vunpack.c.l.b16 %v138
    %v442 = vunpack.c.l.b16 %v139
    %v443 = vunpack.c.l.b16 %v140
    %v444 = vunpack.c.l.b16 %v141
    %v445 = vunpack.c.l.b16 %v142
    %v446 = vunpack.c.l.b16 %v143
    %v447 = vunpack.c.l.b16 %v144
    %v448 = vunpack.c.l.b16 %v145
    %v449 = vunpack.c.l.b16 %v146
    %v450 = vunpack.c.l.b16 %v147
    %v451 = vunpack.c.l.b16 %v148
    %v452 = vunpack.c.l.b16 %v149
    %v453 = vunpack.c.l.b16 %v150
    %v454 = vunpack.c.l.b16 %v151
    %v455 = vunpack.c.l.b16 %v152
    %v456 = vunpack.c.l.b16 %v153
    %v457 = vunpack.c.l.b16 %v154
    %v458 = vunpack.c.l.b16 %v155
    %v459 = vunpack.c.l.b16 %v156
    %v460 = vunpack.c.l.b16 %v157
    %v461 = vunpack.c.l.b16 %v158
    %v462 = vunpack.c.l.b16 %v159
    %v463 = vunpack.c.l.b16 %v160
    %v464 = vunpack.c.l.b16 %v161
    %v465 = vunpack.c.l.b16 %v162
    %v466 = vunpack.c.l.b16 %v163
    %v467 = vunpack.c.l.b16 %v164
    %v468 = vunpack.c.l.b16 %v165
    %v469 = vunpack.c.l.b16 %v166
    %v470 = vunpack.c.l.b16 %v167
    %v471 = vunpack.c.l.b16 %v168
    %v472 = vunpack.c.l.b16 %v169
    %v473 = vunpack.c.l.b16 %v170
    %v474 = vunpack.c.l.b16 %v171
    %v475 = vunpack.c.l.b16 %v172
    %v476 = vunpack.c.l.b16 %v173
    %v477 = vunpack.c.l.b16 %v174
    %v478 = vunpack.c.l.b16 %v175
    %v479 = vunpack.c.l.b16 %v176
    %v480 = vunpack.c.l.b16 %v177
    %v481 = vunpack.c.l.b16 %v178
    %v482 = vunpack.c.l.b16 %v179
    %v483 = vunpack.c.l.b16 %v180
    %v484 = vunpack.c.l.b16 %v181
    %v485 = vunpack.c.l.b16 %v182
    %v486 = vunpack.c.l.b16 %v183
    %v487 = vunpack.c.l.b16 %v184
    %v488 = vunpack.c.l.b16 %v185
    %v489 = vunpack.c.l.b16 %v186
    %v490 = vunpack.c.l.b16 %v187
    %v491 = vunpack.c.l.b16 %v188
    %v492 = vunpack.c.l.b16 %v189
    %v493 = vunpack.c.l.b16 %v190
    %v494 = vunpack.c.l.b16 %v191
    %v495 = vunpack.c.l.b16 %v192
    %v496 = vunpack.c.l.b16 %v193
    %v497 = vunpack.c.l.b16 %v194
    %v498 = vunpack.c.l.b16 %v195
    %v499 = vunpack.c.l.b16 %v196
    %v500 = vunpack.c.l.b16 %v197
    %v501 = vunpack.c.l.b16 %v198
    %v502 = vunpack.c.l.b16 %v199
    %v503 = vunpack.c.l.b16 %v200
    %v504 = vunpack.c.l.b16 %v201
    %v505 = vunpack.c.l.b16 %v202
    %v506 = vunpack.c.l.b16 %v203
    %v507 = vunpack.c.l.b16 %v204
    %v508 = vunpack.c.l.b16 %v205
    %v509 = vunpack.c.l.b16 %v206
    %v510 = vunpack.c.l.b16 %v207
    %v511 = vunpack.c.l.b16 %v208
    %v512 = vunpack.c.l.b16 %v209
    %v513 = vunpack.c.l.b16 %v210
    %v514 = vunpack.c.l.b16 %v211
    %v515 = vunpack.c.l.b16 %v212
    %v516 = vunpack.c.l.b16 %v213
    %v517 = vpack.c.b16 %v390, %v389
    %v518 = vpack.c.b16 %v392, %v391
    %v519 = vpack.c.b16 %v394, %v393
    %v520 = vpack.c.b16 %v396, %v395
    %v521 = vpack.c.b16 %v398, %v397
    %v522 = vpack.c.b16 %v400, %v399
    %v523 = vpack.c.b16 %v402, %v401
    %v524 = vpack.c.b16 %v404, %v403
    %v525 = vpack.c.b16 %v406, %v405
    %v526 = vpack.c.b16 %v408, %v407
    %v527 = vpack.c.b16 %v410, %v409
    %v528 = vpack.c.b16 %v412, %v411
    %v529 = vpack.c.b16 %v414, %v413
    %v530 = vpack.c.b16 %v416, %v415
    %v531 = vpack.c.b16 %v418, %v417
    %v532 = vpack.c.b16 %v420, %v419
    %v533 = vpack.c.b16 %v422, %v421
    %v534 = vpack.c.b16 %v424, %v423
    %v535 = vpack.c.b16 %v426, %v425
    %v536 = vpack.c.b16 %v428, %v427
    %v537 = vpack.c.b16 %v430, %v429
    %v538 = vpack.c.b16 %v432, %v431
    %v539 = vpack.c.b16 %v434, %v433
    %v540 = vpack.c.b16 %v436, %v435
    %v541 = vpack.c.b16 %v438, %v437
    %v542 = vpack.c.b16 %v440, %v439
    %v543 = vpack.c.b16 %v442, %v441
    %v544 = vpack.c.b16 %v444, %v443
    %v545 = vpack.c.b16 %v446, %v445
    %v546 = vpack.c.b16 %v448, %v447
    %v547 = vpack.c.b16 %v450, %v449
    %v548 = vpack.c.b16 %v452, %v451
    %v549 = vpack.c.b16 %v454, %v453
    %v550 = vpack.c.b16 %v456, %v455
    %v551 = vpack.c.b16 %v458, %v457
    %v552 = vpack.c.b16 %v460, %v459
    %v553 = vpack.c.b16 %v462, %v461
    %v554 = vpack.c.b16 %v464, %v463
    %v555 = vpack.c.b16 %v466, %v465
    %v556 = vpack.c.b16 %v468, %v467
    %v557 = vpack.c.b16 %v470, %v469
    %v558 = vpack.c.b16 %v472, %v471
    %v559 = vpack.c.b16 %v474, %v473
    %v560 = vpack.c.b16 %v476, %v475
    %v561 = vpack.c.b16 %v478, %v477
    %v562 = vpack.c.b16 %v480, %v479
    %v563 = vpack.c.b16 %v482, %v481
    %v564 = vpack.c.b16 %v484, %v483
    %v565 = vpack.c.b16 %v486, %v485
    %v566 = vpack.c.b16 %v488, %v487
    %v567 = vpack.c.b16 %v490, %v489
    %v568 = vpack.c.b16 %v492, %v491
    %v569 = vpack.c.b16 %v494, %v493
    %v570 = vpack.c.b16 %v496, %v495
    %v571 = vpack.c.b16 %v498, %v497
    %v572 = vpack.c.b16 %v500, %v499
    %v573 = vpack.c.b16 %v502, %v501
    %v574 = vpack.c.b16 %v504, %v503
    %v575 = vpack.c.b16 %v506, %v505
    %v576 = vpack.c.b16 %v508, %v507
    %v577 = vpack.c.b16 %v510, %v509
    %v578 = vpack.c.b16 %v512, %v511
    %v579 = vpack.c.b16 %v514, %v513
    %v580 = vpack.c.b16 %v516, %v515
    %645 = vmatprep.subr.bf16.mxu0 0
    %646 = vmatpush1.bf16.msra.mxu0 %v524
    %647 = vmatprep.subr.bf16.mxu0 0
    %648 = vmatpush1.bf16.msra.mxu0 %v523
    %649 = vmatprep.subr.bf16.mxu0 0
    %650 = vmatpush1.bf16.msra.mxu0 %v522
    %651 = vmatprep.subr.bf16.mxu0 0
    %652 = vmatpush1.bf16.msra.mxu0 %v521
    %653 = vmatprep.subr.bf16.mxu0 0
    %654 = vmatpush1.bf16.msra.mxu0 %v520
    %655 = vmatprep.subr.bf16.mxu0 0
    %656 = vmatpush1.bf16.msra.mxu0 %v519
    %657 = vmatprep.subr.bf16.mxu0 0
    %658 = vmatpush1.bf16.msra.mxu0 %v518
    %659 = vmatprep.subr.bf16.mxu0 0
    %660 = vmatpush1.bf16.msra.mxu0 %v517
    %661 = vmatprep.subr.bf16.mxu0 0
    %662 = vmatpush2.bf16.msra.mxu0 %v532
    %663 = vmatprep.subr.bf16.mxu0 0
    %664 = vmatpush2.bf16.msra.mxu0 %v531
    %665 = vmatprep.subr.bf16.mxu0 0
    %666 = vmatpush2.bf16.msra.mxu0 %v530
    %667 = vmatprep.subr.bf16.mxu0 0
    %668 = vmatpush2.bf16.msra.mxu0 %v529
    %669 = vmatprep.subr.bf16.mxu0 0
    %670 = vmatpush2.bf16.msra.mxu0 %v528
    %671 = vmatprep.subr.bf16.mxu0 0
    %672 = vmatpush2.bf16.msra.mxu0 %v527
    %673 = vmatprep.subr.bf16.mxu0 0
    %674 = vmatpush2.bf16.msra.mxu0 %v526
    %675 = vmatprep.subr.bf16.mxu0 0
    %676 = vmatpush2.bf16.msra.mxu0 %v525
    %677 = vmatprep.mubr.bf16.mxu0 %v246
    %678 = vmatmul.mubr.bf16.gmra.mxu0 %v245
    %v679 = vpop.f32.mrf.mxu0
    %v680 = vadd.f32 %v219, %v679
    %v681 = vpop.f32.mrf.mxu0
    %v682 = vpop.f32.mrf.mxu0
    %v683 = vadd.f32 %v219, %v682
    %v684 = vpop.f32.mrf.mxu0
    %685 = vdwg.mxu0
    %686 = vmatprep.subr.bf16.mxu0 0
    %687 = vmatpush1.bf16.msra.mxu0 %v540
    %688 = vmatprep.subr.bf16.mxu0 0
    %689 = vmatpush1.bf16.msra.mxu0 %v539
    %690 = vmatprep.subr.bf16.mxu0 0
    %691 = vmatpush1.bf16.msra.mxu0 %v538
    %692 = vmatprep.subr.bf16.mxu0 0
    %693 = vmatpush1.bf16.msra.mxu0 %v537
    %694 = vmatprep.subr.bf16.mxu0 0
    %695 = vmatpush1.bf16.msra.mxu0 %v536
    %696 = vmatprep.subr.bf16.mxu0 0
    %697 = vmatpush1.bf16.msra.mxu0 %v535
    %698 = vmatprep.subr.bf16.mxu0 0
    %699 = vmatpush1.bf16.msra.mxu0 %v534
    %700 = vmatprep.subr.bf16.mxu0 0
    %701 = vmatpush1.bf16.msra.mxu0 %v533
    %702 = vmatprep.subr.bf16.mxu0 0
    %703 = vmatpush2.bf16.msra.mxu0 %v548
    %704 = vmatprep.subr.bf16.mxu0 0
    %705 = vmatpush2.bf16.msra.mxu0 %v547
    %706 = vmatprep.subr.bf16.mxu0 0
    %707 = vmatpush2.bf16.msra.mxu0 %v546
    %708 = vmatprep.subr.bf16.mxu0 0
    %709 = vmatpush2.bf16.msra.mxu0 %v545
    %710 = vmatprep.subr.bf16.mxu0 0
    %711 = vmatpush2.bf16.msra.mxu0 %v544
    %712 = vmatprep.subr.bf16.mxu0 0
    %713 = vmatpush2.bf16.msra.mxu0 %v543
    %714 = vmatprep.subr.bf16.mxu0 0
    %715 = vmatpush2.bf16.msra.mxu0 %v542
    %716 = vmatprep.subr.bf16.mxu0 0
    %717 = vmatpush2.bf16.msra.mxu0 %v541
    %718 = vmatprep.mubr.bf16.mxu0 %v248
    %719 = vmatmul.mubr.bf16.gmra.mxu0 %v247
    %v720 = vpop.f32.mrf.mxu0
    %v721 = vadd.f32 %v680, %v720
    %v722 = vpop.f32.mrf.mxu0
    %v723 = vpop.f32.mrf.mxu0
    %v724 = vadd.f32 %v683, %v723
    %v725 = vpop.f32.mrf.mxu0
    %726 = vdwg.mxu0
    %727 = vmatprep.subr.bf16.mxu0 0
    %728 = vmatpush1.bf16.msra.mxu0 %v556
    %729 = vmatprep.subr.bf16.mxu0 0
    %730 = vmatpush1.bf16.msra.mxu0 %v555
    %731 = vmatprep.subr.bf16.mxu0 0
    %732 = vmatpush1.bf16.msra.mxu0 %v554
    %733 = vmatprep.subr.bf16.mxu0 0
    %734 = vmatpush1.bf16.msra.mxu0 %v553
    %735 = vmatprep.subr.bf16.mxu0 0
    %736 = vmatpush1.bf16.msra.mxu0 %v552
    %737 = vmatprep.subr.bf16.mxu0 0
    %738 = vmatpush1.bf16.msra.mxu0 %v551
    %739 = vmatprep.subr.bf16.mxu0 0
    %740 = vmatpush1.bf16.msra.mxu0 %v550
    %741 = vmatprep.subr.bf16.mxu0 0
    %742 = vmatpush1.bf16.msra.mxu0 %v549
    %743 = vmatprep.subr.bf16.mxu0 0
    %744 = vmatpush2.bf16.msra.mxu0 %v564
    %745 = vmatprep.subr.bf16.mxu0 0
    %746 = vmatpush2.bf16.msra.mxu0 %v563
    %747 = vmatprep.subr.bf16.mxu0 0
    %748 = vmatpush2.bf16.msra.mxu0 %v562
    %749 = vmatprep.subr.bf16.mxu0 0
    %750 = vmatpush2.bf16.msra.mxu0 %v561
    %751 = vmatprep.subr.bf16.mxu0 0
    %752 = vmatpush2.bf16.msra.mxu0 %v560
    %753 = vmatprep.subr.bf16.mxu0 0
    %754 = vmatpush2.bf16.msra.mxu0 %v559
    %755 = vmatprep.subr.bf16.mxu0 0
    %756 = vmatpush2.bf16.msra.mxu0 %v558
    %757 = vmatprep.subr.bf16.mxu0 0
    %758 = vmatpush2.bf16.msra.mxu0 %v557
    %759 = vmatprep.mubr.bf16.mxu0 %v250
    %760 = vmatmul.mubr.bf16.gmra.mxu0 %v249
    %v761 = vpop.f32.mrf.mxu0
    %v762 = vadd.f32 %v721, %v761
    %v763 = vpop.f32.mrf.mxu0
    %v764 = vpop.f32.mrf.mxu0
    %v765 = vadd.f32 %v724, %v764
    %v766 = vpop.f32.mrf.mxu0
    %767 = vdwg.mxu0
    %768 = vmatprep.subr.bf16.mxu0 0
    %769 = vmatpush1.bf16.msra.mxu0 %v572
    %770 = vmatprep.subr.bf16.mxu0 0
    %771 = vmatpush1.bf16.msra.mxu0 %v571
    %772 = vmatprep.subr.bf16.mxu0 0
    %773 = vmatpush1.bf16.msra.mxu0 %v570
    %774 = vmatprep.subr.bf16.mxu0 0
    %775 = vmatpush1.bf16.msra.mxu0 %v569
    %776 = vmatprep.subr.bf16.mxu0 0
    %777 = vmatpush1.bf16.msra.mxu0 %v568
    %778 = vmatprep.subr.bf16.mxu0 0
    %779 = vmatpush1.bf16.msra.mxu0 %v567
    %780 = vmatprep.subr.bf16.mxu0 0
    %781 = vmatpush1.bf16.msra.mxu0 %v566
    %782 = vmatprep.subr.bf16.mxu0 0
    %783 = vmatpush1.bf16.msra.mxu0 %v565
    %784 = vmatprep.subr.bf16.mxu0 0
    %785 = vmatpush2.bf16.msra.mxu0 %v580
    %786 = vmatprep.subr.bf16.mxu0 0
    %787 = vmatpush2.bf16.msra.mxu0 %v579
    %788 = vmatprep.subr.bf16.mxu0 0
    %789 = vmatpush2.bf16.msra.mxu0 %v578
    %790 = vmatprep.subr.bf16.mxu0 0
    %791 = vmatpush2.bf16.msra.mxu0 %v577
    %792 = vmatprep.subr.bf16.mxu0 0
    %793 = vmatpush2.bf16.msra.mxu0 %v576
    %794 = vmatprep.subr.bf16.mxu0 0
    %795 = vmatpush2.bf16.msra.mxu0 %v575
    %796 = vmatprep.subr.bf16.mxu0 0
    %797 = vmatpush2.bf16.msra.mxu0 %v574
    %798 = vmatprep.subr.bf16.mxu0 0
    %799 = vmatpush2.bf16.msra.mxu0 %v573
    %800 = vmatprep.mubr.bf16.mxu0 %v252
    %801 = vmatmul.mubr.bf16.gmra.mxu0 %v251
    %v802 = vpop.f32.mrf.mxu0
    %v803 = vadd.f32 %v762, %v802
    %v804 = vpop.f32.mrf.mxu0
    %v805 = vpop.f32.mrf.mxu0
    %v806 = vadd.f32 %v765, %v805
    %v807 = vpop.f32.mrf.mxu0
    %808 = vdwg.mxu0
    %vm809 = vcmp.gt.f32.partialorder %v803, 0.0
    %vm810 = vcmp.gt.f32.partialorder %v806, 0.0
    %v811 = vmin.f32 %v803, 0.0
    %v812 = vmin.f32 %v806, 0.0
    %v813 = vmul.f32 %v811, 1.442695
    %v814 = vpow.pop %v813
    %v815 = vmul.f32 %v812, 1.442695
    %v816 = vpow.pop %v815
    %v817 = vsub.f32 %v814, 1.0
    %v818 = vsub.f32 %v816, 1.0
    %v819 = vsel %vm809, %v803, %v817
    %v820 = vsel %vm810, %v806, %v818
    %v821 = vpack.c.bf16 %v820, %v819
    %v822 = vld [vmem:[%s4] sm:$0xf]
    %v823 = vld [vmem:[%s4 + $0x4] sm:$0xf]
    %v824 = vld [vmem:[%s4 + $0x8] sm:$0xf]
    %v825 = vld [vmem:[%s4 + $0xc] sm:$0xf]
    %v826 = vld [vmem:[%s4 + $0x10] sm:$0xf]
    %v827 = vld [vmem:[%s4 + $0x14] sm:$0xf]
    %v828 = vld [vmem:[%s4 + $0x18] sm:$0xf]
    %v829 = vld [vmem:[%s4 + $0x1c] sm:$0xf]
    %v830 = vld [vmem:[%s4 + $0x20] sm:$0xf]
    %v831 = vld [vmem:[%s4 + $0x24] sm:$0xf]
    %v832 = vld [vmem:[%s4 + $0x28] sm:$0xf]
    %v833 = vld [vmem:[%s4 + $0x2c] sm:$0xf]
    %v834 = vld [vmem:[%s4 + $0x30] sm:$0xf]
    %v835 = vld [vmem:[%s4 + $0x34] sm:$0xf]
    %v836 = vld [vmem:[%s4 + $0x38] sm:$0xf]
    %v837 = vld [vmem:[%s4 + $0x3c] sm:$0xf]
    %v838 = vld [vmem:[%s5] sm:$0x1]
    %v840 = vlaneseq
    %v841 = vshrl.u32 %v840, 7
    %v842 = vsub.s32 0, %v841
    %v843 = vrot.slane %v838, %v842
    %v861 = vunpack.c.l.b16 %v822
    %v862 = vunpack.c.l.b16 %v823
    %v863 = vunpack.c.l.b16 %v824
    %v864 = vunpack.c.l.b16 %v825
    %v865 = vunpack.c.l.b16 %v826
    %v866 = vunpack.c.l.b16 %v827
    %v867 = vunpack.c.l.b16 %v828
    %v868 = vunpack.c.l.b16 %v829
    %v869 = vunpack.c.l.b16 %v830
    %v870 = vunpack.c.l.b16 %v831
    %v871 = vunpack.c.l.b16 %v832
    %v872 = vunpack.c.l.b16 %v833
    %v873 = vunpack.c.l.b16 %v834
    %v874 = vunpack.c.l.b16 %v835
    %v875 = vunpack.c.l.b16 %v836
    %v876 = vunpack.c.l.b16 %v837
    %v877 = vpack.c.b16 %v862, %v861
    %v878 = vpack.c.b16 %v864, %v863
    %v879 = vpack.c.b16 %v866, %v865
    %v880 = vpack.c.b16 %v868, %v867
    %v881 = vpack.c.b16 %v870, %v869
    %v882 = vpack.c.b16 %v872, %v871
    %v883 = vpack.c.b16 %v874, %v873
    %v884 = vpack.c.b16 %v876, %v875
    %893 = vmatprep.subr.bf16.mxu0 0
    %894 = vmatpush1.bf16.msra.mxu0 %v884
    %895 = vmatprep.subr.bf16.mxu0 0
    %896 = vmatpush1.bf16.msra.mxu0 %v883
    %897 = vmatprep.subr.bf16.mxu0 0
    %898 = vmatpush1.bf16.msra.mxu0 %v882
    %899 = vmatprep.subr.bf16.mxu0 0
    %900 = vmatpush1.bf16.msra.mxu0 %v881
    %901 = vmatprep.subr.bf16.mxu0 0
    %902 = vmatpush1.bf16.msra.mxu0 %v880
    %903 = vmatprep.subr.bf16.mxu0 0
    %904 = vmatpush1.bf16.msra.mxu0 %v879
    %905 = vmatprep.subr.bf16.mxu0 0
    %906 = vmatpush1.bf16.msra.mxu0 %v878
    %907 = vmatprep.subr.bf16.mxu0 0
    %908 = vmatpush1.bf16.msra.mxu0 %v877
    %909 = vmatprep.subr.bf16.mxu0 0
    %910 = vmatpush2.bf16.msra.mxu0 0
    %911 = vmatprep.subr.bf16.mxu0 0
    %912 = vmatpush2.bf16.msra.mxu0 0
    %913 = vmatprep.subr.bf16.mxu0 0
    %914 = vmatpush2.bf16.msra.mxu0 0
    %915 = vmatprep.subr.bf16.mxu0 0
    %916 = vmatpush2.bf16.msra.mxu0 0
    %917 = vmatprep.subr.bf16.mxu0 0
    %918 = vmatpush2.bf16.msra.mxu0 0
    %919 = vmatprep.subr.bf16.mxu0 0
    %920 = vmatpush2.bf16.msra.mxu0 0
    %921 = vmatprep.subr.bf16.mxu0 0
    %922 = vmatpush2.bf16.msra.mxu0 0
    %923 = vmatprep.subr.bf16.mxu0 0
    %924 = vmatpush2.bf16.msra.mxu0 0
    %925 = vmatprep.mubr.bf16.mxu0 0
    %926 = vmatmul.mubr.bf16.gmra.mxu0 %v821
    %v927 = vpop.f32.mrf.mxu0
    %v928 = vadd.f32 %v843, %v927
    %v929 = vpop.f32.mrf.mxu0
    %v930 = vpop.f32.mrf.mxu0
    %v931 = vadd.f32 %v843, %v930
    %v932 = vpop.f32.mrf.mxu0
    %933 = vdwg.mxu0
    %vm934 = vcmp.gt.f32.partialorder %v928, 0.0
    %vm935 = vcmp.gt.f32.partialorder %v931, 0.0
    %v936 = vmin.f32 %v928, 0.0
    %v937 = vmin.f32 %v931, 0.0
    %v938 = vmul.f32 %v936, 1.442695
    %v939 = vpow.pop %v938
    %v940 = vmul.f32 %v937, 1.442695
    %v941 = vpow.pop %v940
    %v942 = vsub.f32 %v939, 1.0
    %v943 = vsub.f32 %v941, 1.0
    %v944 = vsel %vm934, %v928, %v942
    %v945 = vsel %vm935, %v931, %v943
    %v946 = vpack.c.bf16 %v945, %v944
    %v947 = vld [vmem:[%s6] sm:$0xf]
    %v948 = vld [vmem:[%s6 + $0x4] sm:$0xf]
    %v949 = vld [vmem:[%s6 + $0x8] sm:$0xf]
    %v950 = vld [vmem:[%s6 + $0xc] sm:$0xf]
    %v951 = vld [vmem:[%s6 + $0x10] sm:$0xf]
    %v952 = vld [vmem:[%s6 + $0x14] sm:$0xf]
    %v953 = vld [vmem:[%s6 + $0x18] sm:$0xf]
    %v954 = vld [vmem:[%s6 + $0x1c] sm:$0xf]
    %v955 = vld [vmem:[%s7] sm:$0x1]
    %v957 = vlaneseq
    %v958 = vshrl.u32 %v957, 7
    %v959 = vsub.s32 0, %v958
    %v960 = vrot.slane %v955, %v959
    %v970 = vunpack.c.l.b16 %v947
    %v971 = vunpack.c.l.b16 %v948
    %v972 = vunpack.c.l.b16 %v949
    %v973 = vunpack.c.l.b16 %v950
    %v974 = vunpack.c.l.b16 %v951
    %v975 = vunpack.c.l.b16 %v952
    %v976 = vunpack.c.l.b16 %v953
    %v977 = vunpack.c.l.b16 %v954
    %v978 = vpack.c.b16 %v971, %v970
    %v979 = vpack.c.b16 %v973, %v972
    %v980 = vpack.c.b16 %v975, %v974
    %v981 = vpack.c.b16 %v977, %v976
    %vm986 = vcmask 523264
    %v988 = vsel %vm986, %v946, 0
    %990 = vmatprep.subr.bf16.mxu0 0
    %991 = vmatpush1.bf16.msra.mxu0 0
    %992 = vmatprep.subr.bf16.mxu0 0
    %993 = vmatpush1.bf16.msra.mxu0 0
    %994 = vmatprep.subr.bf16.mxu0 0
    %995 = vmatpush1.bf16.msra.mxu0 0
    %996 = vmatprep.subr.bf16.mxu0 0
    %997 = vmatpush1.bf16.msra.mxu0 0
    %998 = vmatprep.subr.bf16.mxu0 0
    %999 = vmatpush1.bf16.msra.mxu0 %v981
    %1000 = vmatprep.subr.bf16.mxu0 0
    %1001 = vmatpush1.bf16.msra.mxu0 %v980
    %1002 = vmatprep.subr.bf16.mxu0 0
    %1003 = vmatpush1.bf16.msra.mxu0 %v979
    %1004 = vmatprep.subr.bf16.mxu0 0
    %1005 = vmatpush1.bf16.msra.mxu0 %v978
    %1006 = vmatprep.subr.bf16.mxu0 0
    %1007 = vmatpush2.bf16.msra.mxu0 0
    %1008 = vmatprep.subr.bf16.mxu0 0
    %1009 = vmatpush2.bf16.msra.mxu0 0
    %1010 = vmatprep.subr.bf16.mxu0 0
    %1011 = vmatpush2.bf16.msra.mxu0 0
    %1012 = vmatprep.subr.bf16.mxu0 0
    %1013 = vmatpush2.bf16.msra.mxu0 0
    %1014 = vmatprep.subr.bf16.mxu0 0
    %1015 = vmatpush2.bf16.msra.mxu0 0
    %1016 = vmatprep.subr.bf16.mxu0 0
    %1017 = vmatpush2.bf16.msra.mxu0 0
    %1018 = vmatprep.subr.bf16.mxu0 0
    %1019 = vmatpush2.bf16.msra.mxu0 0
    %1020 = vmatprep.subr.bf16.mxu0 0
    %1021 = vmatpush2.bf16.msra.mxu0 0
    %1022 = vmatprep.mubr.bf16.mxu0 0
    %1023 = vmatmul.mubr.bf16.gmra.mxu0 %v988
    %v1024 = vpop.f32.mrf.mxu0
    %v1025 = vadd.f32 %v960, %v1024
    %v1026 = vpop.f32.mrf.mxu0
    %v1027 = vpop.f32.mrf.mxu0
    %v1028 = vadd.f32 %v960, %v1027
    %v1029 = vpop.f32.mrf.mxu0
    %1030 = vdwg.mxu0
    %v1031 = vmul.f32 %v1025, 0.5
    %v1032 = vmul.f32 %v1028, 0.5
    %v1033 = vmul.f32 %v1031, 1.442695
    %v1034 = vpow.pop %v1033
    %v1035 = vmul.f32 %v1032, 1.442695
    %v1036 = vpow.pop %v1035
    %v1037 = vld [vmem:[%s1] sm:$0xff]
    %v1038 = vld [vmem:[%s1 + $0x8] sm:$0xff]
    %1041 = vrot.lane.b32.xlu0 %v1034, 64
    %v1042 = vpop.permute.xlu0 %1041
    %1043 = vrot.lane.b32.xlu0 %v1036, 64
    %v1044 = vpop.permute.xlu0 %1043
    %v1047 = vmul.f32 %v1037, %v1042
    %v1048 = vmul.f32 %v1038, %v1044
    %v1049 = vadd.f32 %v1047, %v1025
    %v1050 = vadd.f32 %v1048, %v1028
    %v1051 = vpack.c.bf16 %v1050, %v1049
    %v1052 = vld [vmem:[%s8] sm:$0xf]
    %v1053 = vld [vmem:[%s8 + $0x4] sm:$0xf]
    %v1054 = vld [vmem:[%s8 + $0x8] sm:$0xf]
    %v1055 = vld [vmem:[%s8 + $0xc] sm:$0xf]
    %v1056 = vld [vmem:[%s8 + $0x10] sm:$0xf]
    %v1057 = vld [vmem:[%s8 + $0x14] sm:$0xf]
    %v1058 = vld [vmem:[%s8 + $0x18] sm:$0xf]
    %v1059 = vld [vmem:[%s8 + $0x1c] sm:$0xf]
    %v1060 = vld [vmem:[%s9] sm:$0x1]
    %v1062 = vlaneseq
    %v1063 = vshrl.u32 %v1062, 7
    %v1064 = vsub.s32 0, %v1063
    %v1065 = vrot.slane %v1060, %v1064
    %v1075 = vunpack.c.l.b16 %v1052
    %v1076 = vunpack.c.l.b16 %v1053
    %v1077 = vunpack.c.l.b16 %v1054
    %v1078 = vunpack.c.l.b16 %v1055
    %v1079 = vunpack.c.l.b16 %v1056
    %v1080 = vunpack.c.l.b16 %v1057
    %v1081 = vunpack.c.l.b16 %v1058
    %v1082 = vunpack.c.l.b16 %v1059
    %v1083 = vpack.c.b16 %v1076, %v1075
    %v1084 = vpack.c.b16 %v1078, %v1077
    %v1085 = vpack.c.b16 %v1080, %v1079
    %v1086 = vpack.c.b16 %v1082, %v1081
    %v1092 = vsel %vm986, %v1051, 0
    %1094 = vmatprep.subr.bf16.mxu0 0
    %1095 = vmatpush1.bf16.msra.mxu0 0
    %1096 = vmatprep.subr.bf16.mxu0 0
    %1097 = vmatpush1.bf16.msra.mxu0 0
    %1098 = vmatprep.subr.bf16.mxu0 0
    %1099 = vmatpush1.bf16.msra.mxu0 0
    %1100 = vmatprep.subr.bf16.mxu0 0
    %1101 = vmatpush1.bf16.msra.mxu0 0
    %1102 = vmatprep.subr.bf16.mxu0 0
    %1103 = vmatpush1.bf16.msra.mxu0 %v1086
    %1104 = vmatprep.subr.bf16.mxu0 0
    %1105 = vmatpush1.bf16.msra.mxu0 %v1085
    %1106 = vmatprep.subr.bf16.mxu0 0
    %1107 = vmatpush1.bf16.msra.mxu0 %v1084
    %1108 = vmatprep.subr.bf16.mxu0 0
    %1109 = vmatpush1.bf16.msra.mxu0 %v1083
    %1110 = vmatprep.subr.bf16.mxu0 0
    %1111 = vmatpush2.bf16.msra.mxu0 0
    %1112 = vmatprep.subr.bf16.mxu0 0
    %1113 = vmatpush2.bf16.msra.mxu0 0
    %1114 = vmatprep.subr.bf16.mxu0 0
    %1115 = vmatpush2.bf16.msra.mxu0 0
    %1116 = vmatprep.subr.bf16.mxu0 0
    %1117 = vmatpush2.bf16.msra.mxu0 0
    %1118 = vmatprep.subr.bf16.mxu0 0
    %1119 = vmatpush2.bf16.msra.mxu0 0
    %1120 = vmatprep.subr.bf16.mxu0 0
    %1121 = vmatpush2.bf16.msra.mxu0 0
    %1122 = vmatprep.subr.bf16.mxu0 0
    %1123 = vmatpush2.bf16.msra.mxu0 0
    %1124 = vmatprep.subr.bf16.mxu0 0
    %1125 = vmatpush2.bf16.msra.mxu0 0
    %1126 = vmatprep.mubr.bf16.mxu0 0
    %1127 = vmatmul.mubr.bf16.gmra.mxu0 %v1092
    %v1128 = vpop.f32.mrf.mxu0
    %v1129 = vadd.f32 %v1065, %v1128
    %v1130 = vpop.f32.mrf.mxu0
    %v1131 = vpop.f32.mrf.mxu0
    %v1132 = vadd.f32 %v1065, %v1131
    %v1133 = vpop.f32.mrf.mxu0
    %1134 = vdwg.mxu0
    %vm1135 = vcmp.gt.f32.partialorder %v1129, 0.0
    %vm1136 = vcmp.gt.f32.partialorder %v1132, 0.0
    %v1137 = vmin.f32 %v1129, 0.0
    %v1138 = vmin.f32 %v1132, 0.0
    %v1139 = vmul.f32 %v1137, 1.442695
    %v1140 = vpow.pop %v1139
    %v1141 = vmul.f32 %v1138, 1.442695
    %v1142 = vpow.pop %v1141
    %v1143 = vsub.f32 %v1140, 1.0
    %v1144 = vsub.f32 %v1142, 1.0
    %v1145 = vsel %vm1135, %v1129, %v1143
    %v1146 = vsel %vm1136, %v1132, %v1144
    %v1147 = vpack.c.bf16 %v1146, %v1145
    %v1148 = vld [vmem:[%s10] sm:$0xf]
    %v1149 = vld [vmem:[%s10 + $0x4] sm:$0xf]
    %v1150 = vld [vmem:[%s10 + $0x8] sm:$0xf]
    %v1151 = vld [vmem:[%s10 + $0xc] sm:$0xf]
    %v1152 = vld [vmem:[%s10 + $0x10] sm:$0xf]
    %v1153 = vld [vmem:[%s10 + $0x14] sm:$0xf]
    %v1154 = vld [vmem:[%s10 + $0x18] sm:$0xf]
    %v1155 = vld [vmem:[%s10 + $0x1c] sm:$0xf]
    %v1156 = vld [vmem:[%s11] sm:$0x1]
    %v1158 = vlaneseq
    %v1159 = vshrl.u32 %v1158, 7
    %v1160 = vsub.s32 0, %v1159
    %v1161 = vrot.slane %v1156, %v1160
    %v1171 = vunpack.c.l.b16 %v1148
    %v1172 = vunpack.c.l.b16 %v1149
    %v1173 = vunpack.c.l.b16 %v1150
    %v1174 = vunpack.c.l.b16 %v1151
    %v1175 = vunpack.c.l.b16 %v1152
    %v1176 = vunpack.c.l.b16 %v1153
    %v1177 = vunpack.c.l.b16 %v1154
    %v1178 = vunpack.c.l.b16 %v1155
    %v1179 = vpack.c.b16 %v1172, %v1171
    %v1180 = vpack.c.b16 %v1174, %v1173
    %v1181 = vpack.c.b16 %v1176, %v1175
    %v1182 = vpack.c.b16 %v1178, %v1177
    %v1188 = vsel %vm986, %v1147, 0
    %1190 = vmatprep.subr.bf16.mxu0 0
    %1191 = vmatpush1.bf16.msra.mxu0 0
    %1192 = vmatprep.subr.bf16.mxu0 0
    %1193 = vmatpush1.bf16.msra.mxu0 0
    %1194 = vmatprep.subr.bf16.mxu0 0
    %1195 = vmatpush1.bf16.msra.mxu0 0
    %1196 = vmatprep.subr.bf16.mxu0 0
    %1197 = vmatpush1.bf16.msra.mxu0 0
    %1198 = vmatprep.subr.bf16.mxu0 0
    %1199 = vmatpush1.bf16.msra.mxu0 %v1182
    %1200 = vmatprep.subr.bf16.mxu0 0
    %1201 = vmatpush1.bf16.msra.mxu0 %v1181
    %1202 = vmatprep.subr.bf16.mxu0 0
    %1203 = vmatpush1.bf16.msra.mxu0 %v1180
    %1204 = vmatprep.subr.bf16.mxu0 0
    %1205 = vmatpush1.bf16.msra.mxu0 %v1179
    %1206 = vmatprep.subr.bf16.mxu0 0
    %1207 = vmatpush2.bf16.msra.mxu0 0
    %1208 = vmatprep.subr.bf16.mxu0 0
    %1209 = vmatpush2.bf16.msra.mxu0 0
    %1210 = vmatprep.subr.bf16.mxu0 0
    %1211 = vmatpush2.bf16.msra.mxu0 0
    %1212 = vmatprep.subr.bf16.mxu0 0
    %1213 = vmatpush2.bf16.msra.mxu0 0
    %1214 = vmatprep.subr.bf16.mxu0 0
    %1215 = vmatpush2.bf16.msra.mxu0 0
    %1216 = vmatprep.subr.bf16.mxu0 0
    %1217 = vmatpush2.bf16.msra.mxu0 0
    %1218 = vmatprep.subr.bf16.mxu0 0
    %1219 = vmatpush2.bf16.msra.mxu0 0
    %1220 = vmatprep.subr.bf16.mxu0 0
    %1221 = vmatpush2.bf16.msra.mxu0 0
    %1222 = vmatprep.mubr.bf16.mxu0 0
    %1223 = vmatmul.mubr.bf16.gmra.mxu0 %v1188
    %v1224 = vpop.f32.mrf.mxu0
    %v1225 = vadd.f32 %v1161, %v1224
    %v1226 = vpop.f32.mrf.mxu0
    %v1227 = vpop.f32.mrf.mxu0
    %v1228 = vadd.f32 %v1161, %v1227
    %v1229 = vpop.f32.mrf.mxu0
    %1230 = vdwg.mxu0
    %vm1231 = vcmp.gt.f32.partialorder %v1225, 0.0
    %vm1232 = vcmp.gt.f32.partialorder %v1228, 0.0
    %v1233 = vmin.f32 %v1225, 0.0
    %v1234 = vmin.f32 %v1228, 0.0
    %v1235 = vmul.f32 %v1233, 1.442695
    %v1236 = vpow.pop %v1235
    %v1237 = vmul.f32 %v1234, 1.442695
    %v1238 = vpow.pop %v1237
    %v1239 = vsub.f32 %v1236, 1.0
    %v1240 = vsub.f32 %v1238, 1.0
    %v1241 = vsel %vm1231, %v1225, %v1239
    %v1242 = vsel %vm1232, %v1228, %v1240
    %v1243 = vpack.c.bf16 %v1242, %v1241
    %v1244 = vld [vmem:[#allocation4] sm:$0xff]
    %v1245 = vld [vmem:[#allocation4 + $0x8] sm:$0xff]
    %v1246 = vld [vmem:[#allocation4 + $0x10] sm:$0xff]
    %v1247 = vld [vmem:[#allocation4 + $0x18] sm:$0xff]
    %v1248 = vld [vmem:[#allocation4 + $0x20] sm:$0xff]
    %v1249 = vld [vmem:[#allocation4 + $0x28] sm:$0xff]
    %v1250 = vld [vmem:[#allocation4 + $0x30] sm:$0xff]
    %v1251 = vld [vmem:[#allocation4 + $0x38] sm:$0xff]
    %v1252 = vld [vmem:[#allocation4 + $0x40] sm:$0xff]
    %v1253 = vld [vmem:[#allocation4 + $0x48] sm:$0xff]
    %v1254 = vld [vmem:[#allocation4 + $0x50] sm:$0xff]
    %v1255 = vld [vmem:[#allocation4 + $0x58] sm:$0xff]
    %v1256 = vld [vmem:[#allocation4 + $0x60] sm:$0xff]
    %v1257 = vld [vmem:[#allocation4 + $0x68] sm:$0xff]
    %v1258 = vld [vmem:[#allocation4 + $0x70] sm:$0xff]
    %v1259 = vld [vmem:[#allocation4 + $0x78] sm:$0xff]
    %v1260 = vld [vmem:[#allocation4 + $0x80] sm:$0xff]
    %v1261 = vld [vmem:[#allocation4 + $0x88] sm:$0xff]
    %v1262 = vld [vmem:[#allocation4 + $0x90] sm:$0xff]
    %v1263 = vld [vmem:[#allocation4 + $0x98] sm:$0xff]
    %v1264 = vld [vmem:[#allocation4 + $0xa0] sm:$0xff]
    %v1265 = vld [vmem:[#allocation4 + $0xa8] sm:$0xff]
    %v1266 = vld [vmem:[#allocation4 + $0xb0] sm:$0xff]
    %v1267 = vld [vmem:[#allocation4 + $0xb8] sm:$0xff]
    %v1268 = vld [vmem:[#allocation4 + $0xc0] sm:$0xff]
    %v1269 = vld [vmem:[#allocation4 + $0xc8] sm:$0xff]
    %v1270 = vld [vmem:[#allocation4 + $0xd0] sm:$0xff]
    %v1271 = vld [vmem:[#allocation4 + $0xd8] sm:$0xff]
    %v1272 = vld [vmem:[#allocation4 + $0xe0] sm:$0xff]
    %v1273 = vld [vmem:[#allocation4 + $0xe8] sm:$0xff]
    %v1274 = vld [vmem:[#allocation4 + $0xf0] sm:$0xff]
    %v1275 = vld [vmem:[#allocation4 + $0xf8] sm:$0xff]
    %v1276 = vld [vmem:[#allocation4 + $0x100] sm:$0xff]
    %v1277 = vld [vmem:[#allocation4 + $0x108] sm:$0xff]
    %v1278 = vld [vmem:[#allocation4 + $0x110] sm:$0xff]
    %v1279 = vld [vmem:[#allocation4 + $0x118] sm:$0xff]
    %v1280 = vld [vmem:[#allocation4 + $0x120] sm:$0xff]
    %v1281 = vld [vmem:[#allocation4 + $0x128] sm:$0xff]
    %v1282 = vld [vmem:[#allocation4 + $0x130] sm:$0xff]
    %v1283 = vld [vmem:[#allocation4 + $0x138] sm:$0xff]
    %v1284 = vld [vmem:[#allocation4 + $0x140] sm:$0xff]
    %v1285 = vld [vmem:[#allocation4 + $0x148] sm:$0xff]
    %v1286 = vld [vmem:[#allocation4 + $0x150] sm:$0xff]
    %v1287 = vld [vmem:[#allocation4 + $0x158] sm:$0xff]
    %v1288 = vld [vmem:[#allocation4 + $0x160] sm:$0xff]
    %v1289 = vld [vmem:[#allocation4 + $0x168] sm:$0xff]
    %v1290 = vld [vmem:[#allocation4 + $0x170] sm:$0xff]
    %v1291 = vld [vmem:[#allocation4 + $0x178] sm:$0xff]
    %v1292 = vld [vmem:[#allocation4 + $0x180] sm:$0xff]
    %v1293 = vld [vmem:[#allocation4 + $0x188] sm:$0xff]
    %v1294 = vld [vmem:[#allocation4 + $0x190] sm:$0xff]
    %v1295 = vld [vmem:[#allocation4 + $0x198] sm:$0xff]
    %v1296 = vld [vmem:[#allocation4 + $0x1a0] sm:$0xff]
    %v1297 = vld [vmem:[#allocation4 + $0x1a8] sm:$0xff]
    %v1298 = vld [vmem:[#allocation4 + $0x1b0] sm:$0xff]
    %v1299 = vld [vmem:[#allocation4 + $0x1b8] sm:$0xff]
    %v1300 = vld [vmem:[#allocation4 + $0x1c0] sm:$0xff]
    %v1301 = vld [vmem:[#allocation4 + $0x1c8] sm:$0xff]
    %v1302 = vld [vmem:[#allocation4 + $0x1d0] sm:$0xff]
    %v1303 = vld [vmem:[#allocation4 + $0x1d8] sm:$0xff]
    %v1304 = vld [vmem:[#allocation4 + $0x1e0] sm:$0xff]
    %v1305 = vld [vmem:[#allocation4 + $0x1e8] sm:$0xff]
    %v1306 = vld [vmem:[#allocation4 + $0x1f0] sm:$0xff]
    %v1307 = vld [vmem:[#allocation4 + $0x1f8] sm:$0xff]
    %v1308 = vld [vmem:[%s13] sm:$0xff]
    %v1310 = vlaneseq
    %v1311 = vshrl.u32 %v1310, 7
    %v1312 = vsub.s32 0, %v1311
    %v1313 = vrot.slane %v1308, %v1312
    %v1314 = vlaneseq
    %v1315 = vshrl.u32 %v1314, 7
    %v1316 = vsub.s32 1, %v1315
    %v1317 = vrot.slane %v1308, %v1316
    %v1318 = vlaneseq
    %v1319 = vshrl.u32 %v1318, 7
    %v1320 = vsub.s32 2, %v1319
    %v1321 = vrot.slane %v1308, %v1320
    %v1322 = vlaneseq
    %v1323 = vshrl.u32 %v1322, 7
    %v1324 = vsub.s32 3, %v1323
    %v1325 = vrot.slane %v1308, %v1324
    %v1326 = vlaneseq
    %v1327 = vshrl.u32 %v1326, 7
    %v1328 = vsub.s32 4, %v1327
    %v1329 = vrot.slane %v1308, %v1328
    %v1330 = vlaneseq
    %v1331 = vshrl.u32 %v1330, 7
    %v1332 = vsub.s32 5, %v1331
    %v1333 = vrot.slane %v1308, %v1332
    %v1334 = vlaneseq
    %v1335 = vshrl.u32 %v1334, 7
    %v1336 = vsub.s32 6, %v1335
    %v1337 = vrot.slane %v1308, %v1336
    %v1338 = vlaneseq
    %v1339 = vshrl.u32 %v1338, 7
    %v1340 = vsub.s32 7, %v1339
    %v1341 = vrot.slane %v1308, %v1340
    %v1414 = vunpack.c.l.b16 %v1244
    %v1415 = vunpack.c.h.b16 %v1244
    %v1416 = vunpack.c.l.b16 %v1245
    %v1417 = vunpack.c.h.b16 %v1245
    %v1418 = vunpack.c.l.b16 %v1246
    %v1419 = vunpack.c.h.b16 %v1246
    %v1420 = vunpack.c.l.b16 %v1247
    %v1421 = vunpack.c.h.b16 %v1247
    %v1422 = vunpack.c.l.b16 %v1248
    %v1423 = vunpack.c.h.b16 %v1248
    %v1424 = vunpack.c.l.b16 %v1249
    %v1425 = vunpack.c.h.b16 %v1249
    %v1426 = vunpack.c.l.b16 %v1250
    %v1427 = vunpack.c.h.b16 %v1250
    %v1428 = vunpack.c.l.b16 %v1251
    %v1429 = vunpack.c.h.b16 %v1251
    %v1430 = vunpack.c.l.b16 %v1252
    %v1431 = vunpack.c.h.b16 %v1252
    %v1432 = vunpack.c.l.b16 %v1253
    %v1433 = vunpack.c.h.b16 %v1253
    %v1434 = vunpack.c.l.b16 %v1254
    %v1435 = vunpack.c.h.b16 %v1254
    %v1436 = vunpack.c.l.b16 %v1255
    %v1437 = vunpack.c.h.b16 %v1255
    %v1438 = vunpack.c.l.b16 %v1256
    %v1439 = vunpack.c.h.b16 %v1256
    %v1440 = vunpack.c.l.b16 %v1257
    %v1441 = vunpack.c.h.b16 %v1257
    %v1442 = vunpack.c.l.b16 %v1258
    %v1443 = vunpack.c.h.b16 %v1258
    %v1444 = vunpack.c.l.b16 %v1259
    %v1445 = vunpack.c.h.b16 %v1259
    %v1446 = vunpack.c.l.b16 %v1260
    %v1447 = vunpack.c.h.b16 %v1260
    %v1448 = vunpack.c.l.b16 %v1261
    %v1449 = vunpack.c.h.b16 %v1261
    %v1450 = vunpack.c.l.b16 %v1262
    %v1451 = vunpack.c.h.b16 %v1262
    %v1452 = vunpack.c.l.b16 %v1263
    %v1453 = vunpack.c.h.b16 %v1263
    %v1454 = vunpack.c.l.b16 %v1264
    %v1455 = vunpack.c.h.b16 %v1264
    %v1456 = vunpack.c.l.b16 %v1265
    %v1457 = vunpack.c.h.b16 %v1265
    %v1458 = vunpack.c.l.b16 %v1266
    %v1459 = vunpack.c.h.b16 %v1266
    %v1460 = vunpack.c.l.b16 %v1267
    %v1461 = vunpack.c.h.b16 %v1267
    %v1462 = vunpack.c.l.b16 %v1268
    %v1463 = vunpack.c.h.b16 %v1268
    %v1464 = vunpack.c.l.b16 %v1269
    %v1465 = vunpack.c.h.b16 %v1269
    %v1466 = vunpack.c.l.b16 %v1270
    %v1467 = vunpack.c.h.b16 %v1270
    %v1468 = vunpack.c.l.b16 %v1271
    %v1469 = vunpack.c.h.b16 %v1271
    %v1470 = vunpack.c.l.b16 %v1272
    %v1471 = vunpack.c.h.b16 %v1272
    %v1472 = vunpack.c.l.b16 %v1273
    %v1473 = vunpack.c.h.b16 %v1273
    %v1474 = vunpack.c.l.b16 %v1274
    %v1475 = vunpack.c.h.b16 %v1274
    %v1476 = vunpack.c.l.b16 %v1275
    %v1477 = vunpack.c.h.b16 %v1275
    %v1478 = vunpack.c.l.b16 %v1276
    %v1479 = vunpack.c.h.b16 %v1276
    %v1480 = vunpack.c.l.b16 %v1277
    %v1481 = vunpack.c.h.b16 %v1277
    %v1482 = vunpack.c.l.b16 %v1278
    %v1483 = vunpack.c.h.b16 %v1278
    %v1484 = vunpack.c.l.b16 %v1279
    %v1485 = vunpack.c.h.b16 %v1279
    %v1486 = vunpack.c.l.b16 %v1280
    %v1487 = vunpack.c.h.b16 %v1280
    %v1488 = vunpack.c.l.b16 %v1281
    %v1489 = vunpack.c.h.b16 %v1281
    %v1490 = vunpack.c.l.b16 %v1282
    %v1491 = vunpack.c.h.b16 %v1282
    %v1492 = vunpack.c.l.b16 %v1283
    %v1493 = vunpack.c.h.b16 %v1283
    %v1494 = vunpack.c.l.b16 %v1284
    %v1495 = vunpack.c.h.b16 %v1284
    %v1496 = vunpack.c.l.b16 %v1285
    %v1497 = vunpack.c.h.b16 %v1285
    %v1498 = vunpack.c.l.b16 %v1286
    %v1499 = vunpack.c.h.b16 %v1286
    %v1500 = vunpack.c.l.b16 %v1287
    %v1501 = vunpack.c.h.b16 %v1287
    %v1502 = vunpack.c.l.b16 %v1288
    %v1503 = vunpack.c.h.b16 %v1288
    %v1504 = vunpack.c.l.b16 %v1289
    %v1505 = vunpack.c.h.b16 %v1289
    %v1506 = vunpack.c.l.b16 %v1290
    %v1507 = vunpack.c.h.b16 %v1290
    %v1508 = vunpack.c.l.b16 %v1291
    %v1509 = vunpack.c.h.b16 %v1291
    %v1510 = vunpack.c.l.b16 %v1292
    %v1511 = vunpack.c.h.b16 %v1292
    %v1512 = vunpack.c.l.b16 %v1293
    %v1513 = vunpack.c.h.b16 %v1293
    %v1514 = vunpack.c.l.b16 %v1294
    %v1515 = vunpack.c.h.b16 %v1294
    %v1516 = vunpack.c.l.b16 %v1295
    %v1517 = vunpack.c.h.b16 %v1295
    %v1518 = vunpack.c.l.b16 %v1296
    %v1519 = vunpack.c.h.b16 %v1296
    %v1520 = vunpack.c.l.b16 %v1297
    %v1521 = vunpack.c.h.b16 %v1297
    %v1522 = vunpack.c.l.b16 %v1298
    %v1523 = vunpack.c.h.b16 %v1298
    %v1524 = vunpack.c.l.b16 %v1299
    %v1525 = vunpack.c.h.b16 %v1299
    %v1526 = vunpack.c.l.b16 %v1300
    %v1527 = vunpack.c.h.b16 %v1300
    %v1528 = vunpack.c.l.b16 %v1301
    %v1529 = vunpack.c.h.b16 %v1301
    %v1530 = vunpack.c.l.b16 %v1302
    %v1531 = vunpack.c.h.b16 %v1302
    %v1532 = vunpack.c.l.b16 %v1303
    %v1533 = vunpack.c.h.b16 %v1303
    %v1534 = vunpack.c.l.b16 %v1304
    %v1535 = vunpack.c.h.b16 %v1304
    %v1536 = vunpack.c.l.b16 %v1305
    %v1537 = vunpack.c.h.b16 %v1305
    %v1538 = vunpack.c.l.b16 %v1306
    %v1539 = vunpack.c.h.b16 %v1306
    %v1540 = vunpack.c.l.b16 %v1307
    %v1541 = vunpack.c.h.b16 %v1307
    %v1542 = vpack.c.b16 %v1422, %v1414
    %v1543 = vpack.c.b16 %v1423, %v1415
    %v1544 = vpack.c.b16 %v1424, %v1416
    %v1545 = vpack.c.b16 %v1425, %v1417
    %v1546 = vpack.c.b16 %v1426, %v1418
    %v1547 = vpack.c.b16 %v1427, %v1419
    %v1548 = vpack.c.b16 %v1428, %v1420
    %v1549 = vpack.c.b16 %v1429, %v1421
    %v1550 = vpack.c.b16 %v1438, %v1430
    %v1551 = vpack.c.b16 %v1439, %v1431
    %v1552 = vpack.c.b16 %v1440, %v1432
    %v1553 = vpack.c.b16 %v1441, %v1433
    %v1554 = vpack.c.b16 %v1442, %v1434
    %v1555 = vpack.c.b16 %v1443, %v1435
    %v1556 = vpack.c.b16 %v1444, %v1436
    %v1557 = vpack.c.b16 %v1445, %v1437
    %v1558 = vpack.c.b16 %v1454, %v1446
    %v1559 = vpack.c.b16 %v1455, %v1447
    %v1560 = vpack.c.b16 %v1456, %v1448
    %v1561 = vpack.c.b16 %v1457, %v1449
    %v1562 = vpack.c.b16 %v1458, %v1450
    %v1563 = vpack.c.b16 %v1459, %v1451
    %v1564 = vpack.c.b16 %v1460, %v1452
    %v1565 = vpack.c.b16 %v1461, %v1453
    %v1566 = vpack.c.b16 %v1470, %v1462
    %v1567 = vpack.c.b16 %v1471, %v1463
    %v1568 = vpack.c.b16 %v1472, %v1464
    %v1569 = vpack.c.b16 %v1473, %v1465
    %v1570 = vpack.c.b16 %v1474, %v1466
    %v1571 = vpack.c.b16 %v1475, %v1467
    %v1572 = vpack.c.b16 %v1476, %v1468
    %v1573 = vpack.c.b16 %v1477, %v1469
    %v1574 = vpack.c.b16 %v1486, %v1478
    %v1575 = vpack.c.b16 %v1487, %v1479
    %v1576 = vpack.c.b16 %v1488, %v1480
    %v1577 = vpack.c.b16 %v1489, %v1481
    %v1578 = vpack.c.b16 %v1490, %v1482
    %v1579 = vpack.c.b16 %v1491, %v1483
    %v1580 = vpack.c.b16 %v1492, %v1484
    %v1581 = vpack.c.b16 %v1493, %v1485
    %v1582 = vpack.c.b16 %v1502, %v1494
    %v1583 = vpack.c.b16 %v1503, %v1495
    %v1584 = vpack.c.b16 %v1504, %v1496
    %v1585 = vpack.c.b16 %v1505, %v1497
    %v1586 = vpack.c.b16 %v1506, %v1498
    %v1587 = vpack.c.b16 %v1507, %v1499
    %v1588 = vpack.c.b16 %v1508, %v1500
    %v1589 = vpack.c.b16 %v1509, %v1501
    %v1590 = vpack.c.b16 %v1518, %v1510
    %v1591 = vpack.c.b16 %v1519, %v1511
    %v1592 = vpack.c.b16 %v1520, %v1512
    %v1593 = vpack.c.b16 %v1521, %v1513
    %v1594 = vpack.c.b16 %v1522, %v1514
    %v1595 = vpack.c.b16 %v1523, %v1515
    %v1596 = vpack.c.b16 %v1524, %v1516
    %v1597 = vpack.c.b16 %v1525, %v1517
    %v1598 = vpack.c.b16 %v1534, %v1526
    %v1599 = vpack.c.b16 %v1535, %v1527
    %v1600 = vpack.c.b16 %v1536, %v1528
    %v1601 = vpack.c.b16 %v1537, %v1529
    %v1602 = vpack.c.b16 %v1538, %v1530
    %v1603 = vpack.c.b16 %v1539, %v1531
    %v1604 = vpack.c.b16 %v1540, %v1532
    %v1605 = vpack.c.b16 %v1541, %v1533
    %1670 = vmatprep.subr.bf16.mxu0 %v1599
    %1671 = vmatpush1.bf16.msra.mxu0 %v1598
    %1672 = vmatprep.subr.bf16.mxu0 %v1591
    %1673 = vmatpush1.bf16.msra.mxu0 %v1590
    %1674 = vmatprep.subr.bf16.mxu0 %v1583
    %1675 = vmatpush1.bf16.msra.mxu0 %v1582
    %1676 = vmatprep.subr.bf16.mxu0 %v1575
    %1677 = vmatpush1.bf16.msra.mxu0 %v1574
    %1678 = vmatprep.subr.bf16.mxu0 %v1567
    %1679 = vmatpush1.bf16.msra.mxu0 %v1566
    %1680 = vmatprep.subr.bf16.mxu0 %v1559
    %1681 = vmatpush1.bf16.msra.mxu0 %v1558
    %1682 = vmatprep.subr.bf16.mxu0 %v1551
    %1683 = vmatpush1.bf16.msra.mxu0 %v1550
    %1684 = vmatprep.subr.bf16.mxu0 %v1543
    %1685 = vmatpush1.bf16.msra.mxu0 %v1542
    %1686 = vmatprep.subr.bf16.mxu0 0
    %1687 = vmatpush2.bf16.msra.mxu0 0
    %1688 = vmatprep.subr.bf16.mxu0 0
    %1689 = vmatpush2.bf16.msra.mxu0 0
    %1690 = vmatprep.subr.bf16.mxu0 0
    %1691 = vmatpush2.bf16.msra.mxu0 0
    %1692 = vmatprep.subr.bf16.mxu0 0
    %1693 = vmatpush2.bf16.msra.mxu0 0
    %1694 = vmatprep.subr.bf16.mxu0 0
    %1695 = vmatpush2.bf16.msra.mxu0 0
    %1696 = vmatprep.subr.bf16.mxu0 0
    %1697 = vmatpush2.bf16.msra.mxu0 0
    %1698 = vmatprep.subr.bf16.mxu0 0
    %1699 = vmatpush2.bf16.msra.mxu0 0
    %1700 = vmatprep.subr.bf16.mxu0 0
    %1701 = vmatpush2.bf16.msra.mxu0 0
    %1702 = vmatprep.mubr.bf16.mxu0 0
    %1703 = vmatmul.mubr.bf16.gmra.mxu0 %v1243
    %v1704 = vpop.f32.mrf.mxu0
    %v1705 = vadd.f32 %v1313, %v1704
    %v1706 = vpop.f32.mrf.mxu0
    %v1707 = vadd.f32 %v1317, %v1706
    %v1708 = vpop.f32.mrf.mxu0
    %v1709 = vadd.f32 %v1313, %v1708
    %v1710 = vpop.f32.mrf.mxu0
    %v1711 = vadd.f32 %v1317, %v1710
    %1712 = vdwg.mxu0
    %1713 = vmatprep.subr.bf16.mxu0 %v1601
    %1714 = vmatpush1.bf16.msra.mxu0 %v1600
    %1715 = vmatprep.subr.bf16.mxu0 %v1593
    %1716 = vmatpush1.bf16.msra.mxu0 %v1592
    %1717 = vmatprep.subr.bf16.mxu0 %v1585
    %1718 = vmatpush1.bf16.msra.mxu0 %v1584
    %1719 = vmatprep.subr.bf16.mxu0 %v1577
    %1720 = vmatpush1.bf16.msra.mxu0 %v1576
    %1721 = vmatprep.subr.bf16.mxu0 %v1569
    %1722 = vmatpush1.bf16.msra.mxu0 %v1568
    %1723 = vmatprep.subr.bf16.mxu0 %v1561
    %1724 = vmatpush1.bf16.msra.mxu0 %v1560
    %1725 = vmatprep.subr.bf16.mxu0 %v1553
    %1726 = vmatpush1.bf16.msra.mxu0 %v1552
    %1727 = vmatprep.subr.bf16.mxu0 %v1545
    %1728 = vmatpush1.bf16.msra.mxu0 %v1544
    %1729 = vmatprep.subr.bf16.mxu0 0
    %1730 = vmatpush2.bf16.msra.mxu0 0
    %1731 = vmatprep.subr.bf16.mxu0 0
    %1732 = vmatpush2.bf16.msra.mxu0 0
    %1733 = vmatprep.subr.bf16.mxu0 0
    %1734 = vmatpush2.bf16.msra.mxu0 0
    %1735 = vmatprep.subr.bf16.mxu0 0
    %1736 = vmatpush2.bf16.msra.mxu0 0
    %1737 = vmatprep.subr.bf16.mxu0 0
    %1738 = vmatpush2.bf16.msra.mxu0 0
    %1739 = vmatprep.subr.bf16.mxu0 0
    %1740 = vmatpush2.bf16.msra.mxu0 0
    %1741 = vmatprep.subr.bf16.mxu0 0
    %1742 = vmatpush2.bf16.msra.mxu0 0
    %1743 = vmatprep.subr.bf16.mxu0 0
    %1744 = vmatpush2.bf16.msra.mxu0 0
    %1745 = vmatprep.mubr.bf16.mxu0 0
    %1746 = vmatmul.mubr.bf16.gmra.mxu0 %v1243
    %v1747 = vpop.f32.mrf.mxu0
    %v1748 = vadd.f32 %v1321, %v1747
    %v1749 = vpop.f32.mrf.mxu0
    %v1750 = vadd.f32 %v1325, %v1749
    %v1751 = vpop.f32.mrf.mxu0
    %v1752 = vadd.f32 %v1321, %v1751
    %v1753 = vpop.f32.mrf.mxu0
    %v1754 = vadd.f32 %v1325, %v1753
    %1755 = vdwg.mxu0
    %1756 = vmatprep.subr.bf16.mxu0 %v1603
    %1757 = vmatpush1.bf16.msra.mxu0 %v1602
    %1758 = vmatprep.subr.bf16.mxu0 %v1595
    %1759 = vmatpush1.bf16.msra.mxu0 %v1594
    %1760 = vmatprep.subr.bf16.mxu0 %v1587
    %1761 = vmatpush1.bf16.msra.mxu0 %v1586
    %1762 = vmatprep.subr.bf16.mxu0 %v1579
    %1763 = vmatpush1.bf16.msra.mxu0 %v1578
    %1764 = vmatprep.subr.bf16.mxu0 %v1571
    %1765 = vmatpush1.bf16.msra.mxu0 %v1570
    %1766 = vmatprep.subr.bf16.mxu0 %v1563
    %1767 = vmatpush1.bf16.msra.mxu0 %v1562
    %1768 = vmatprep.subr.bf16.mxu0 %v1555
    %1769 = vmatpush1.bf16.msra.mxu0 %v1554
    %1770 = vmatprep.subr.bf16.mxu0 %v1547
    %1771 = vmatpush1.bf16.msra.mxu0 %v1546
    %1772 = vmatprep.subr.bf16.mxu0 0
    %1773 = vmatpush2.bf16.msra.mxu0 0
    %1774 = vmatprep.subr.bf16.mxu0 0
    %1775 = vmatpush2.bf16.msra.mxu0 0
    %1776 = vmatprep.subr.bf16.mxu0 0
    %1777 = vmatpush2.bf16.msra.mxu0 0
    %1778 = vmatprep.subr.bf16.mxu0 0
    %1779 = vmatpush2.bf16.msra.mxu0 0
    %1780 = vmatprep.subr.bf16.mxu0 0
    %1781 = vmatpush2.bf16.msra.mxu0 0
    %1782 = vmatprep.subr.bf16.mxu0 0
    %1783 = vmatpush2.bf16.msra.mxu0 0
    %1784 = vmatprep.subr.bf16.mxu0 0
    %1785 = vmatpush2.bf16.msra.mxu0 0
    %1786 = vmatprep.subr.bf16.mxu0 0
    %1787 = vmatpush2.bf16.msra.mxu0 0
    %1788 = vmatprep.mubr.bf16.mxu0 0
    %1789 = vmatmul.mubr.bf16.gmra.mxu0 %v1243
    %v1790 = vpop.f32.mrf.mxu0
    %v1791 = vadd.f32 %v1329, %v1790
    %v1792 = vpop.f32.mrf.mxu0
    %v1793 = vadd.f32 %v1333, %v1792
    %v1794 = vpop.f32.mrf.mxu0
    %v1795 = vadd.f32 %v1329, %v1794
    %v1796 = vpop.f32.mrf.mxu0
    %v1797 = vadd.f32 %v1333, %v1796
    %1798 = vdwg.mxu0
    %1799 = vmatprep.subr.bf16.mxu0 %v1605
    %1800 = vmatpush1.bf16.msra.mxu0 %v1604
    %1801 = vmatprep.subr.bf16.mxu0 %v1597
    %1802 = vmatpush1.bf16.msra.mxu0 %v1596
    %1803 = vmatprep.subr.bf16.mxu0 %v1589
    %1804 = vmatpush1.bf16.msra.mxu0 %v1588
    %1805 = vmatprep.subr.bf16.mxu0 %v1581
    %1806 = vmatpush1.bf16.msra.mxu0 %v1580
    %1807 = vmatprep.subr.bf16.mxu0 %v1573
    %1808 = vmatpush1.bf16.msra.mxu0 %v1572
    %1809 = vmatprep.subr.bf16.mxu0 %v1565
    %1810 = vmatpush1.bf16.msra.mxu0 %v1564
    %1811 = vmatprep.subr.bf16.mxu0 %v1557
    %1812 = vmatpush1.bf16.msra.mxu0 %v1556
    %1813 = vmatprep.subr.bf16.mxu0 %v1549
    %1814 = vmatpush1.bf16.msra.mxu0 %v1548
    %1815 = vmatprep.subr.bf16.mxu0 0
    %1816 = vmatpush2.bf16.msra.mxu0 0
    %1817 = vmatprep.subr.bf16.mxu0 0
    %1818 = vmatpush2.bf16.msra.mxu0 0
    %1819 = vmatprep.subr.bf16.mxu0 0
    %1820 = vmatpush2.bf16.msra.mxu0 0
    %1821 = vmatprep.subr.bf16.mxu0 0
    %1822 = vmatpush2.bf16.msra.mxu0 0
    %1823 = vmatprep.subr.bf16.mxu0 0
    %1824 = vmatpush2.bf16.msra.mxu0 0
    %1825 = vmatprep.subr.bf16.mxu0 0
    %1826 = vmatpush2.bf16.msra.mxu0 0
    %1827 = vmatprep.subr.bf16.mxu0 0
    %1828 = vmatpush2.bf16.msra.mxu0 0
    %1829 = vmatprep.subr.bf16.mxu0 0
    %1830 = vmatpush2.bf16.msra.mxu0 0
    %1831 = vmatprep.mubr.bf16.mxu0 0
    %1832 = vmatmul.mubr.bf16.gmra.mxu0 %v1243
    %v1833 = vpop.f32.mrf.mxu0
    %v1834 = vadd.f32 %v1337, %v1833
    %v1835 = vpop.f32.mrf.mxu0
    %v1836 = vadd.f32 %v1341, %v1835
    %v1837 = vpop.f32.mrf.mxu0
    %v1838 = vadd.f32 %v1337, %v1837
    %v1839 = vpop.f32.mrf.mxu0
    %v1840 = vadd.f32 %v1341, %v1839
    %1841 = vdwg.mxu0
    %1842 = vst [vmem:[%s14] sm:$0xff] %v1705
    %1843 = vst [vmem:[%s14 + $0x8] sm:$0xff] %v1707
    %1844 = vst [vmem:[%s14 + $0x10] sm:$0xff] %v1748
    %1845 = vst [vmem:[%s14 + $0x18] sm:$0xff] %v1750
    %1846 = vst [vmem:[%s14 + $0x20] sm:$0xff] %v1791
    %1847 = vst [vmem:[%s14 + $0x28] sm:$0xff] %v1793
    %1848 = vst [vmem:[%s14 + $0x30] sm:$0xff] %v1834
    %1849 = vst [vmem:[%s14 + $0x38] sm:$0xff] %v1836
    %1850 = vst [vmem:[%s14 + $0x40] sm:$0xff] %v1709
    %1851 = vst [vmem:[%s14 + $0x48] sm:$0xff] %v1711
    %1852 = vst [vmem:[%s14 + $0x50] sm:$0xff] %v1752
    %1853 = vst [vmem:[%s14 + $0x58] sm:$0xff] %v1754
    %1854 = vst [vmem:[%s14 + $0x60] sm:$0xff] %v1795
    %1855 = vst [vmem:[%s14 + $0x68] sm:$0xff] %v1797
    %1856 = vst [vmem:[%s14 + $0x70] sm:$0xff] %v1838
    %1857 = vst [vmem:[%s14 + $0x78] sm:$0xff] %v1840
    %1858 = vst [vmem:[%s15] sm:$0xff] %v1025
    %1859 = vst [vmem:[%s15 + $0x8] sm:$0xff] %v1028
    // Predicated region
    $region66: #{vae_forward.1} parent=1 // pred_check
      _
    $region67: #{vae_forward.1} parent=1 // pred_check_branch
      %1861 = sbr.rel (0) target = $region69
    $region68: #{vae_forward.1} parent=1 // pred_region
      _
    $region69: #{vae_forward.1} parent=1 // pred_fallthru
      _
    // Predicated region
    $region70: #{vae_forward.1} parent=1 // pred_check
      _
    $region71: #{vae_forward.1} parent=1 // pred_check_branch
      %1863 = sbr.rel (0) target = $region73
    $region72: #{vae_forward.1} parent=1 // pred_region
      _
    $region73: #{vae_forward.1} parent=1 // pred_fallthru
      _
    // Predicated region
    $region74: #{vae_forward.1} parent=1 // pred_check
      _
    $region75: #{vae_forward.1} parent=1 // pred_check_branch
      %1865 = sbr.rel (0) target = $region77
    $region76: #{vae_forward.1} parent=1 // pred_region
      _
    $region77: #{vae_forward.1} parent=1 // pred_fallthru
      _
    // Predicated region
    $region78: #{vae_forward.1} parent=1 // pred_check
      _
    $region79: #{vae_forward.1} parent=1 // pred_check_branch
      %1867 = sbr.rel (0) target = $region81
    $region80: #{vae_forward.1} parent=1 // pred_region
      _
    $region81: #{vae_forward.1} parent=1 // pred_fallthru
      _
    %1868 = vsyncpa [#allocation3], 1
    %1869 = vsyncpa [#allocation5], 1

</llo_original>
